<compile_context>
chip_gen: v5e
topology: v5e:2x2
jax: 0.10.0
libtpu: 0.0.40
codegen_flags: <defaults>
</compile_context>

<pallas_src>
import jax
import jax.numpy as jnp
from jax.experimental import pallas as pl
from jax.experimental.pallas import tpu as pltpu

HEAD_LANES = 128   # MXU output lanes for the (zero-padded) wide/deep heads
MAX_TILE_B = 4096  # upper bound on the batch tile (review: 1024-4096)


def _round_up(x, m):
    return ((x + m - 1) // m) * m


def _choose_tile(batch, max_tile_b=MAX_TILE_B):
    """Batch tile: multiple of 128 (for the transpose epilogue), <= max_tile_b,
    and sized so the grid has >= 2 steps whenever the batch allows it
    (v7x: 2 TensorCores via dimension_semantics=('parallel',))."""
    max_tile_b = _round_up(max_tile_b, 128)
    tile = min(max_tile_b, _round_up(pl.cdiv(batch, 2), 128))
    return max(tile, 128)


def _wide_and_deep_kernel(
    x_ref,                       # [TB, F]     bf16  (concat(deep, wide) features)
    w1_ref, b1_ref,              # [F, H1]     bf16 / [1, H1] f32
    w2_ref, b2_ref,              # [H1, H2]    bf16 / [1, H2] f32
    w3_ref, b3_ref,              # [H2, H3]    bf16 / [1, H3] f32
    w_out_ref,                   # [H3, 128]   bf16  (col 0 = deep output head)
    w_wide_ref,                  # [F, 128]    bf16  (wide rows, col 0 = wide head)
    b_final_ref,                 # [1]         f32   SMEM scalar (b_out + b_wide)
    out_ref,                     # [1, TB//128, 128] f32  probabilities, lane-dense
):
    x = x_ref[...]

    # Deep MLP (dropout = identity in eval mode): bf16 operands on the MXU,
    # f32 accumulation, f32 elementwise, re-cast to bf16 for the next MXU pass.
    h = jnp.dot(x, w1_ref[...], preferred_element_type=jnp.float32) + b1_ref[...]
    h = jnp.maximum(h, 0.0).astype(jnp.bfloat16)
    h = jnp.dot(h, w2_ref[...], preferred_element_type=jnp.float32) + b2_ref[...]
    h = jnp.maximum(h, 0.0).astype(jnp.bfloat16)
    h = jnp.dot(h, w3_ref[...], preferred_element_type=jnp.float32) + b3_ref[...]
    h = jnp.maximum(h, 0.0).astype(jnp.bfloat16)

    # Fused output projection: deep head + wide head, both zero-padded to 128
    # output lanes (a full MXU pass either way).  Only column 0 is live.
    z_pad = (jnp.dot(h, w_out_ref[...], preferred_element_type=jnp.float32)
             + jnp.dot(x, w_wide_ref[...], preferred_element_type=jnp.float32))

    # Move the single live logit column onto lanes: one 128x128 XLU transpose per
    # 128-row sub-block (XLU slot has slack), keeping only row 0 of each
    # transposed block.  Writeback shrinks from 512 B to 4 B per example and the
    # sigmoid below runs on live data only.
    n_sub = z_pad.shape[0] // 128
    rows = []
    for s in range(n_sub):                                       # static unroll
        blk_t = jnp.transpose(z_pad[s * 128:(s + 1) * 128, :])   # [128, 128]
        rows.append(blk_t[0:1, :])                               # [1, 128] logits
    zt = jnp.concatenate(rows, axis=0) + b_final_ref[0]          # [n_sub, 128]

    # Numerically stable sigmoid on the small live tile (exact reciprocal).
    e = jnp.exp(-jnp.abs(zt))                                    # in (0, 1]
    r = 1.0 / (1.0 + e)
    out_ref[0] = jnp.where(zt >= 0.0, r, e * r)


def wide_and_deep_forward(x_cat, packed, *, max_tile_b=MAX_TILE_B):
    """x_cat: [B, deep_dim + wide_dim] features.  Returns [B, 1] f32 probs."""
    batch, feat = x_cat.shape
    x_cat = x_cat.astype(jnp.bfloat16)

    tile = _choose_tile(batch, max_tile_b)
    if batch < tile:
        # Only possible for tiny batches (< 128 rows): pad up to one full tile.
        x_cat = jnp.pad(x_cat, ((0, tile - batch), (0, 0)))
    n_tiles = pl.cdiv(max(batch, tile), tile)   # last block may be partial: OK,
    n_sub = tile // 128                         # garbage tail rows are sliced off.

    const = lambda shape: pl.BlockSpec(shape, lambda i: (0, 0))  # VMEM-resident weights

    out = pl.pallas_call(
        _wide_and_deep_kernel,
        out_shape=jax.ShapeDtypeStruct((n_tiles, n_sub, 128), jnp.float32),
        grid=(n_tiles,),
        in_specs=[
            pl.BlockSpec((tile, feat), lambda i: (i, 0)),        # activations: batch-tiled
            const(packed["w1"].shape), const(packed["b1"].shape),
            const(packed["w2"].shape), const(packed["b2"].shape),
            const(packed["w3"].shape), const(packed["b3"].shape),
            const(packed["w_out"].shape),
            const(packed["w_wide"].shape),
            pl.BlockSpec(memory_space=pltpu.MemorySpace.SMEM),   # scalar output bias
        ],
        out_specs=pl.BlockSpec((1, n_sub, 128), lambda i: (i, 0, 0)),
        compiler_params=pltpu.CompilerParams(
            dimension_semantics=("parallel",),        # v7x: batch tiles over both TCs
            vmem_limit_bytes=32 * 1024 * 1024),       # headroom for 4096-row tiles (v5e default is 16 MiB)
    )(x_cat,
      packed["w1"], packed["b1"],
      packed["w2"], packed["b2"],
      packed["w3"], packed["b3"],
      packed["w_out"], packed["w_wide"],
      packed["b_final"])

    return out.reshape(-1)[:batch].reshape(batch, 1)


def init_params(key, wide_features, vocab_size, embed_dims, hidden_units):
    """Parameter init matching torch nn.Linear / nn.Embedding defaults (f32)."""
    n_keys = 2 * (len(hidden_units) + 2) + len(embed_dims)
    keys = jax.random.split(key, n_keys)
    ki = iter(range(n_keys))

    def dense(kw, kb, fan_in, fan_out):
        lim = 1.0 / float(fan_in) ** 0.5
        w = jax.random.uniform(kw, (fan_in, fan_out), jnp.float32, -lim, lim)
        b = jax.random.uniform(kb, (1, fan_out), jnp.float32, -lim, lim)
        return w, b

    params = {}
    params["w_wide"], params["b_wide"] = dense(keys[next(ki)], keys[next(ki)],
                                               wide_features, 1)
    emb_tables = {}
    total_embed = 0
    for feat, dim in embed_dims.items():
        emb_tables[feat] = jax.random.normal(keys[next(ki)], (vocab_size, dim),
                                             jnp.float32)
        total_embed += dim

    prev = total_embed
    for i, h in enumerate(hidden_units, start=1):
        params[f"w{i}"], params[f"b{i}"] = dense(keys[next(ki)], keys[next(ki)],
                                                 prev, h)
        prev = h
    params["w_out"], params["b_out"] = dense(keys[next(ki)], keys[next(ki)],
                                             hidden_units[-1], 1)
    return params, emb_tables


def pack_params(params, wide_features, deep_in_dim, out_lanes=HEAD_LANES):
    """Cast matmul weights to bf16 and repack for the fused kernel:
       * layer-1 weight zero-augmented over the appended wide columns,
       * wide / deep output heads zero-padded to `out_lanes` output columns,
       * the two scalar output biases folded into one SMEM scalar."""
    bf16 = jnp.bfloat16
    f_cat = deep_in_dim + wide_features

    w1 = params["w1"].astype(bf16)                               # [deep_in, H1]
    w1_aug = jnp.zeros((f_cat, w1.shape[1]), bf16).at[:deep_in_dim, :].set(w1)

    w_wide = params["w_wide"].astype(bf16)                       # [wide_features, 1]
    w_wide_aug = jnp.zeros((f_cat, out_lanes), bf16).at[deep_in_dim:, :1].set(w_wide)

    w_out = params["w_out"].astype(bf16)                         # [H3, 1]
    w_out_pad = jnp.zeros((w_out.shape[0], out_lanes), bf16).at[:, :1].set(w_out)

    return {
        "w1": w1_aug, "b1": params["b1"].astype(jnp.float32),
        "w2": params["w2"].astype(bf16), "b2": params["b2"].astype(jnp.float32),
        "w3": params["w3"].astype(bf16), "b3": params["b3"].astype(jnp.float32),
        "w_out": w_out_pad, "w_wide": w_wide_aug,
        "b_final": (params["b_out"] + params["b_wide"]).reshape((1,)).astype(jnp.float32),
    }


def embed_and_concat(emb_tables, deep_categorical_inputs, embed_dims):
    """Glue: embedding gather + concat along feature axis (dim=1)."""
    outs = []
    for feat in embed_dims:  # preserve dict insertion order like ModuleDict
        outs.append(jnp.take(emb_tables[feat], deep_categorical_inputs[feat], axis=0))
    return jnp.concatenate(outs, axis=1)


def reference_forward(x_cat, packed):
    """Pure-JAX mirror of the kernel math (same bf16/f32 dtype flow)."""
    x = x_cat.astype(jnp.bfloat16)
    h = jnp.maximum(jnp.dot(x, packed["w1"], preferred_element_type=jnp.float32)
                    + packed["b1"], 0.0).astype(jnp.bfloat16)
    h = jnp.maximum(jnp.dot(h, packed["w2"], preferred_element_type=jnp.float32)
                    + packed["b2"], 0.0).astype(jnp.bfloat16)
    h = jnp.maximum(jnp.dot(h, packed["w3"], preferred_element_type=jnp.float32)
                    + packed["b3"], 0.0).astype(jnp.bfloat16)
    z = (jnp.dot(h, packed["w_out"], preferred_element_type=jnp.float32)
         + jnp.dot(x, packed["w_wide"], preferred_element_type=jnp.float32))[:, :1]
    return jax.nn.sigmoid(z + packed["b_final"][0])


if __name__ == "__main__":
    B = 512                                   # demo batch -> tile 256, grid of 2
    wide_features = 16
    vocab = 50                                # vocab size per categorical feature
    embed_dims = {"user": 16, "item": 16}     # total deep input dim = 32
    hidden_units = [256, 128, 64]

    key = jax.random.PRNGKey(0)
    k_params, k_wide, k_user, k_item = jax.random.split(key, 4)

    params, emb_tables = init_params(k_params, wide_features, vocab,
                                     embed_dims, hidden_units)
    deep_in_dim = sum(embed_dims.values())
    packed = pack_params(params, wide_features, deep_in_dim)

    wide_input = jax.random.normal(k_wide, (B, wide_features), jnp.float32)
    deep_categorical_inputs = {
        "user": jax.random.randint(k_user, (B,), 0, vocab),
        "item": jax.random.randint(k_item, (B,), 0, vocab),
    }

    # Embedding gather + concat stays in JAX glue; wide features appended so the
    # kernel sees a single activation operand.
    deep_input = embed_and_concat(emb_tables, deep_categorical_inputs, embed_dims)
    x_cat = jnp.concatenate([deep_input, wide_input], axis=1)

    fwd = jax.jit(wide_and_deep_forward)
    out = jax.block_until_ready(fwd(x_cat, packed))
    ref = jax.block_until_ready(reference_forward(x_cat, packed))

    assert out.shape == (B, 1), out.shape
    assert bool(jnp.all(jnp.isfinite(out)))
    assert bool(jnp.allclose(out, ref, atol=2e-3, rtol=2e-3)), (
        "max abs err = %g" % float(jnp.max(jnp.abs(out - ref))))
    print("KERNEL_OK")
</pallas_src>

<mosaic_0001>
module attributes {stable_mosaic.version = 11 : i64} {
  func.func @_wide_and_deep_kernel(%arg0: i32, %arg1: memref<256x48xbf16, #tpu.memory_space<vmem>>, %arg2: memref<48x256xbf16, #tpu.memory_space<vmem>>, %arg3: memref<1x256xf32, #tpu.memory_space<vmem>>, %arg4: memref<256x128xbf16, #tpu.memory_space<vmem>>, %arg5: memref<1x128xf32, #tpu.memory_space<vmem>>, %arg6: memref<128x64xbf16, #tpu.memory_space<vmem>>, %arg7: memref<1x64xf32, #tpu.memory_space<vmem>>, %arg8: memref<64x128xbf16, #tpu.memory_space<vmem>>, %arg9: memref<48x128xbf16, #tpu.memory_space<vmem>>, %arg10: memref<1xf32, #tpu.memory_space<smem>>, %arg11: memref<1x2x128xf32, #tpu.memory_space<vmem>>) attributes {dimension_semantics = [#tpu.dimension_semantics<parallel>], iteration_bounds = array<i64: 2>, scalar_prefetch = 0 : i64, scratch_operands = 0 : i64, tpu.core_type = #tpu.core_type<tc>, window_params = [{transform_indices = @transform_0, window_bounds = array<i64: 256, 48>}, {pipeline_mode = #tpu.pipeline_mode<synchronous>, transform_indices = @transform_1, window_bounds = array<i64: 48, 256>}, {pipeline_mode = #tpu.pipeline_mode<synchronous>, transform_indices = @transform_2, window_bounds = array<i64: 1, 256>}, {pipeline_mode = #tpu.pipeline_mode<synchronous>, transform_indices = @transform_3, window_bounds = array<i64: 256, 128>}, {pipeline_mode = #tpu.pipeline_mode<synchronous>, transform_indices = @transform_4, window_bounds = array<i64: 1, 128>}, {pipeline_mode = #tpu.pipeline_mode<synchronous>, transform_indices = @transform_5, window_bounds = array<i64: 128, 64>}, {pipeline_mode = #tpu.pipeline_mode<synchronous>, transform_indices = @transform_6, window_bounds = array<i64: 1, 64>}, {pipeline_mode = #tpu.pipeline_mode<synchronous>, transform_indices = @transform_7, window_bounds = array<i64: 64, 128>}, {pipeline_mode = #tpu.pipeline_mode<synchronous>, transform_indices = @transform_8, window_bounds = array<i64: 48, 128>}, {transform_indices = @transform_9, window_bounds = array<i64: 1>}, {transform_indices = @transform_10, window_bounds = array<i64: 1, 2, 128>}]} {
    %c0 = arith.constant 0 : index
    %c0_0 = arith.constant 0 : index
    %0 = vector.load %arg1[%c0, %c0_0] : memref<256x48xbf16, #tpu.memory_space<vmem>>, vector<256x48xbf16>
    %c0_1 = arith.constant 0 : index
    %c0_2 = arith.constant 0 : index
    %1 = vector.load %arg2[%c0_1, %c0_2] : memref<48x256xbf16, #tpu.memory_space<vmem>>, vector<48x256xbf16>
    %cst = arith.constant dense<0.000000e+00> : vector<256x256xf32>
    %2 = tpu.matmul %0, %1, %cst {dimension_numbers = #tpu.dot_dimension_numbers<[1], [0], [0], [1], [0, 0, 1, 1], [], []>} : vector<256x48xbf16>, vector<48x256xbf16>, vector<256x256xf32> -> vector<256x256xf32>
    %c0_3 = arith.constant 0 : index
    %c0_4 = arith.constant 0 : index
    %3 = vector.load %arg3[%c0_3, %c0_4] : memref<1x256xf32, #tpu.memory_space<vmem>>, vector<1x256xf32>
    %4 = vector.broadcast %3 : vector<1x256xf32> to vector<256x256xf32>
    %5 = arith.addf %2, %4 : vector<256x256xf32>
    %cst_5 = arith.constant 0.000000e+00 : f32
    %6 = vector.broadcast %cst_5 : f32 to vector<256x256xf32>
    %7 = arith.maximumf %5, %6 : vector<256x256xf32>
    %8 = arith.truncf %7 : vector<256x256xf32> to vector<256x256xbf16>
    %c0_6 = arith.constant 0 : index
    %c0_7 = arith.constant 0 : index
    %9 = vector.load %arg4[%c0_6, %c0_7] : memref<256x128xbf16, #tpu.memory_space<vmem>>, vector<256x128xbf16>
    %cst_8 = arith.constant dense<0.000000e+00> : vector<256x128xf32>
    %10 = tpu.matmul %8, %9, %cst_8 {dimension_numbers = #tpu.dot_dimension_numbers<[1], [0], [0], [1], [0, 0, 1, 1], [], []>} : vector<256x256xbf16>, vector<256x128xbf16>, vector<256x128xf32> -> vector<256x128xf32>
    %c0_9 = arith.constant 0 : index
    %c0_10 = arith.constant 0 : index
    %11 = vector.load %arg5[%c0_9, %c0_10] : memref<1x128xf32, #tpu.memory_space<vmem>>, vector<1x128xf32>
    %12 = vector.broadcast %11 : vector<1x128xf32> to vector<256x128xf32>
    %13 = arith.addf %10, %12 : vector<256x128xf32>
    %cst_11 = arith.constant 0.000000e+00 : f32
    %14 = vector.broadcast %cst_11 : f32 to vector<256x128xf32>
    %15 = arith.maximumf %13, %14 : vector<256x128xf32>
    %16 = arith.truncf %15 : vector<256x128xf32> to vector<256x128xbf16>
    %c0_12 = arith.constant 0 : index
    %c0_13 = arith.constant 0 : index
    %17 = vector.load %arg6[%c0_12, %c0_13] : memref<128x64xbf16, #tpu.memory_space<vmem>>, vector<128x64xbf16>
    %cst_14 = arith.constant dense<0.000000e+00> : vector<256x64xf32>
    %18 = tpu.matmul %16, %17, %cst_14 {dimension_numbers = #tpu.dot_dimension_numbers<[1], [0], [0], [1], [0, 0, 1, 1], [], []>} : vector<256x128xbf16>, vector<128x64xbf16>, vector<256x64xf32> -> vector<256x64xf32>
    %c0_15 = arith.constant 0 : index
    %c0_16 = arith.constant 0 : index
    %19 = vector.load %arg7[%c0_15, %c0_16] : memref<1x64xf32, #tpu.memory_space<vmem>>, vector<1x64xf32>
    %20 = vector.broadcast %19 : vector<1x64xf32> to vector<256x64xf32>
    %21 = arith.addf %18, %20 : vector<256x64xf32>
    %cst_17 = arith.constant 0.000000e+00 : f32
    %22 = vector.broadcast %cst_17 : f32 to vector<256x64xf32>
    %23 = arith.maximumf %21, %22 : vector<256x64xf32>
    %24 = arith.truncf %23 : vector<256x64xf32> to vector<256x64xbf16>
    %c0_18 = arith.constant 0 : index
    %c0_19 = arith.constant 0 : index
    %25 = vector.load %arg8[%c0_18, %c0_19] : memref<64x128xbf16, #tpu.memory_space<vmem>>, vector<64x128xbf16>
    %cst_20 = arith.constant dense<0.000000e+00> : vector<256x128xf32>
    %26 = tpu.matmul %24, %25, %cst_20 {dimension_numbers = #tpu.dot_dimension_numbers<[1], [0], [0], [1], [0, 0, 1, 1], [], []>} : vector<256x64xbf16>, vector<64x128xbf16>, vector<256x128xf32> -> vector<256x128xf32>
    %c0_21 = arith.constant 0 : index
    %c0_22 = arith.constant 0 : index
    %27 = vector.load %arg9[%c0_21, %c0_22] : memref<48x128xbf16, #tpu.memory_space<vmem>>, vector<48x128xbf16>
    %cst_23 = arith.constant dense<0.000000e+00> : vector<256x128xf32>
    %28 = tpu.matmul %0, %27, %cst_23 {dimension_numbers = #tpu.dot_dimension_numbers<[1], [0], [0], [1], [0, 0, 1, 1], [], []>} : vector<256x48xbf16>, vector<48x128xbf16>, vector<256x128xf32> -> vector<256x128xf32>
    %29 = arith.addf %26, %28 : vector<256x128xf32>
    %30 = vector.extract_strided_slice %29 {offsets = [0, 0], sizes = [128, 128], strides = [1, 1]} : vector<256x128xf32> to vector<128x128xf32>
    %31 = tpu.transpose %30, [1, 0] : vector<128x128xf32> -> vector<128x128xf32>
    %32 = vector.extract_strided_slice %31 {offsets = [0, 0], sizes = [1, 128], strides = [1, 1]} : vector<128x128xf32> to vector<1x128xf32>
    %33 = vector.extract_strided_slice %29 {offsets = [128, 0], sizes = [128, 128], strides = [1, 1]} : vector<256x128xf32> to vector<128x128xf32>
    %34 = tpu.transpose %33, [1, 0] : vector<128x128xf32> -> vector<128x128xf32>
    %35 = vector.extract_strided_slice %34 {offsets = [0, 0], sizes = [1, 128], strides = [1, 1]} : vector<128x128xf32> to vector<1x128xf32>
    %36 = tpu.concatenate %32, %35 in 0 : vector<1x128xf32>, vector<1x128xf32> -> vector<2x128xf32>
    %c0_24 = arith.constant 0 : index
    %37 = memref.load %arg10[%c0_24] : memref<1xf32, #tpu.memory_space<smem>>
    %38 = vector.broadcast %37 : f32 to vector<2x128xf32>
    %39 = arith.addf %36, %38 : vector<2x128xf32>
    %40 = math.absf %39 : vector<2x128xf32>
    %cst_25 = arith.constant 0.000000e+00 : f32
    %41 = vector.broadcast %cst_25 : f32 to vector<2x128xf32>
    %42 = arith.subf %41, %40 : vector<2x128xf32>
    %43 = math.exp %42 : vector<2x128xf32>
    %cst_26 = arith.constant 1.000000e+00 : f32
    %44 = vector.broadcast %cst_26 : f32 to vector<2x128xf32>
    %45 = arith.addf %44, %43 : vector<2x128xf32>
    %cst_27 = arith.constant 1.000000e+00 : f32
    %46 = vector.broadcast %cst_27 : f32 to vector<2x128xf32>
    %47 = arith.divf %46, %45 : vector<2x128xf32>
    %cst_28 = arith.constant 0.000000e+00 : f32
    %48 = vector.broadcast %cst_28 : f32 to vector<2x128xf32>
    %49 = arith.cmpf oge, %39, %48 : vector<2x128xf32>
    %50 = arith.mulf %43, %47 : vector<2x128xf32>
    %51 = arith.select %49, %47, %50 : vector<2x128xi1>, vector<2x128xf32>
    %c0_29 = arith.constant 0 : index
    %c0_30 = arith.constant 0 : index
    %c0_31 = arith.constant 0 : index
    %52 = vector.load %arg11[%c0_29, %c0_30, %c0_31] : memref<1x2x128xf32, #tpu.memory_space<vmem>>, vector<1x2x128xf32>
    %53 = vector.shape_cast %52 : vector<1x2x128xf32> to vector<2x128xf32>
    %54 = vector.shape_cast %51 : vector<2x128xf32> to vector<1x2x128xf32>
    tpu.vector_store %arg11[%c0_29, %c0_30, %c0_31], %54 {strides = array<i32>} : memref<1x2x128xf32, #tpu.memory_space<vmem>>, vector<1x2x128xf32>,
    return
  }
  func.func @transform_0(%arg0: i32) -> (i32, i32) {
    %c0_i32 = arith.constant 0 : i32
    %c0_i32_0 = arith.constant 0 : i32
    return %arg0, %c0_i32 : i32, i32
  }
  func.func @transform_1(%arg0: i32) -> (i32, i32) {
    %c0_i32 = arith.constant 0 : i32
    %c0_i32_0 = arith.constant 0 : i32
    %c0_i32_1 = arith.constant 0 : i32
    return %c0_i32, %c0_i32_0 : i32, i32
  }
  func.func @transform_2(%arg0: i32) -> (i32, i32) {
    %c0_i32 = arith.constant 0 : i32
    %c0_i32_0 = arith.constant 0 : i32
    %c0_i32_1 = arith.constant 0 : i32
    return %c0_i32, %c0_i32_0 : i32, i32
  }
  func.func @transform_3(%arg0: i32) -> (i32, i32) {
    %c0_i32 = arith.constant 0 : i32
    %c0_i32_0 = arith.constant 0 : i32
    %c0_i32_1 = arith.constant 0 : i32
    return %c0_i32, %c0_i32_0 : i32, i32
  }
  func.func @transform_4(%arg0: i32) -> (i32, i32) {
    %c0_i32 = arith.constant 0 : i32
    %c0_i32_0 = arith.constant 0 : i32
    %c0_i32_1 = arith.constant 0 : i32
    return %c0_i32, %c0_i32_0 : i32, i32
  }
  func.func @transform_5(%arg0: i32) -> (i32, i32) {
    %c0_i32 = arith.constant 0 : i32
    %c0_i32_0 = arith.constant 0 : i32
    %c0_i32_1 = arith.constant 0 : i32
    return %c0_i32, %c0_i32_0 : i32, i32
  }
  func.func @transform_6(%arg0: i32) -> (i32, i32) {
    %c0_i32 = arith.constant 0 : i32
    %c0_i32_0 = arith.constant 0 : i32
    %c0_i32_1 = arith.constant 0 : i32
    return %c0_i32, %c0_i32_0 : i32, i32
  }
  func.func @transform_7(%arg0: i32) -> (i32, i32) {
    %c0_i32 = arith.constant 0 : i32
    %c0_i32_0 = arith.constant 0 : i32
    %c0_i32_1 = arith.constant 0 : i32
    return %c0_i32, %c0_i32_0 : i32, i32
  }
  func.func @transform_8(%arg0: i32) -> (i32, i32) {
    %c0_i32 = arith.constant 0 : i32
    %c0_i32_0 = arith.constant 0 : i32
    %c0_i32_1 = arith.constant 0 : i32
    return %c0_i32, %c0_i32_0 : i32, i32
  }
  func.func @transform_9(%arg0: i32) -> i32 {
    %c0_i32 = arith.constant 0 : i32
    %c0_i32_0 = arith.constant 0 : i32
    return %c0_i32 : i32
  }
  func.func @transform_10(%arg0: i32) -> (i32, i32, i32) {
    %c0_i32 = arith.constant 0 : i32
    %c0_i32_0 = arith.constant 0 : i32
    %c0_i32_1 = arith.constant 0 : i32
    return %arg0, %c0_i32, %c0_i32_0 : i32, i32, i32
  }
}

</mosaic_0001>

<llo_original>
// kernel: wide_and_deep_forward.1
$region0: #{wide_and_deep_forward.1}
  #allocation0 [shape = 'u32[]', space=smem, size = 0x4, offset = 0x4, fixed_abs, tag = 'smem constant byte address 0x4 - core index']
  #allocation1 [shape = 'u32[72,128]{1,0:T(1,128)}', space=vmem, size = 0x9000, scoped, tag = 'internal scratch']
  #allocation2 [shape = 'f32[1]{0:T(128)S(6)}', space=smem, size = 0x200, scoped, tag = 'scoped memory for wide_and_deep_forward.1']
  %s0 = inlined_call_operand.vmem [shape: bf16[512,48], index: 0, kind: input, shape index: {}]
  %s1 = inlined_call_operand.vmem [shape: bf16[48,256], index: 1, kind: input, shape index: {}]
  %s2 = inlined_call_operand.vmem [shape: f32[1,256], index: 2, kind: input, shape index: {}]
  %s3 = inlined_call_operand.vmem [shape: bf16[256,128], index: 3, kind: input, shape index: {}]
  %s4 = inlined_call_operand.vmem [shape: f32[1,128], index: 4, kind: input, shape index: {}]
  %s5 = inlined_call_operand.vmem [shape: bf16[128,64], index: 5, kind: input, shape index: {}]
  %s6 = inlined_call_operand.vmem [shape: f32[1,64], index: 6, kind: input, shape index: {}]
  %s7 = inlined_call_operand.vmem [shape: bf16[64,128], index: 7, kind: input, shape index: {}]
  %s8 = inlined_call_operand.vmem [shape: bf16[48,128], index: 8, kind: input, shape index: {}]
  %s9 = inlined_call_operand.<no memory space> [shape: f32[1], index: 9, kind: input, shape index: {}]
  %s10 = inlined_call_operand.hbm [shape: f32[2,2,128], index: 10, kind: output, shape index: {}]
  %s11 = sld [smem:[#allocation0]]
  $region73: #{wide_and_deep_forward.1} parent=0
    _
  %s13 = ssub.s32 1, %s11
  %s14 = scalar_select 0, %s13, %s11
  %15 = sst [smem:[#allocation2]] %s9
  $region1: #{wide_and_deep_forward.1} parent=0
    #allocation3 [shape = 'u8[2048]{0}', space=vmem, size = 0x800, scoped, tag = 'output window, operand 0']
    #allocation4 [shape = 's32[2]{0}', space=sflag, size = 0x8, scoped, tag = 'scoped memory for wide_and_deep_forward.1']
    %16 = vsyncpa [#allocation4], 0
    %s17 = scalar_lea.sflag [#allocation4], 1
    %18 = vsyncpa %s17, 0
    loop: start=0, step=1, limit=4
    $region2: #{wide_and_deep_forward.1} parent=1 // loop_pre_header
      _
    $region3: #{wide_and_deep_forward.1} parent=1 // loop_header
      %s20 = sphi 0, %s24
      %p21 = scmp.ge.s32.totalorder %s20, 4
      %s30 = sphi 0, %s32
      %s33 = sphi 0, %s30
      %s34 = sphi 0, %s33
      %s50 = sphi 0, %s34
      %s54 = sphi 0, %s54
      %s56 = sphi 0, %s54
      %s57 = sphi 0, %s56
      %s71 = sphi 0, %s57
      %s75 = sphi 0, %s75
      %s77 = sphi 0, %s75
      %s78 = sphi 0, %s77
      %s92 = sphi 0, %s78
      %s96 = sphi 0, %s96
      %s98 = sphi 0, %s96
      %s99 = sphi 0, %s98
      %s113 = sphi 0, %s99
      %s117 = sphi 0, %s117
      %s119 = sphi 0, %s117
      %s120 = sphi 0, %s119
      %s134 = sphi 0, %s120
      %s138 = sphi 0, %s138
      %s140 = sphi 0, %s138
      %s141 = sphi 0, %s140
      %s155 = sphi 0, %s141
      %s159 = sphi 0, %s159
      %s161 = sphi 0, %s159
      %s162 = sphi 0, %s161
      %s176 = sphi 0, %s162
      %s180 = sphi 0, %s180
      %s182 = sphi 0, %s180
      %s183 = sphi 0, %s182
      %s197 = sphi 0, %s183
      %s201 = sphi 0, %s201
      %s203 = sphi 0, %s201
      %s204 = sphi 0, %s203
      %s218 = sphi 0, %s204
      %s222 = sphi 0, %s222
      %s224 = sphi 0, %s222
      %s225 = sphi 0, %s224
      %s239 = sphi 0, %s225
      %s245 = sphi 0, %s247
      %s248 = sphi 0, %s245
      %s249 = sphi 0, %s248
      %s265 = sphi 0, %s249
    $region4: #{wide_and_deep_forward.1} parent=1 // loop_header_branch
      %23 = sbr.rel (%p21) target = $region8
    $region5: #{wide_and_deep_forward.1} parent=1 // loop_body
      %s25 = ssub.s32 %s20, 1
      %s26 = ssub.s32 %s20, 2
      %s27 = sadd.s32 %s20, 1
      %s28 = ssub.s32 %s20, %s27
      %p29 = scmp.eq.s32.totalorder %s28, 0
      %s31 = sadd.s32 %s30, 1
      %s32 = scalar_select %p29, %s30, %s31
      %p35 = pneg %p29
      %p36 = scmp.eq.s32.totalorder %s20, 1
      %p37 = por %p35, %p36
      %p38 = scmp.ne.s32.totalorder %s30, %s33
      %p39 = scmp.eq.s32.totalorder %s20, 0
      %p40 = por %p38, %p39
      %p41 = scmp.ne.s32.totalorder %s30, %s33
      %p42 = scmp.eq.s32.totalorder %s25, 1
      %p43 = por %p41, %p42
      %p44 = scmp.ne.s32.totalorder %s33, %s34
      %p45 = scmp.eq.s32.totalorder %s25, 0
      %p46 = por %p44, %p45
      %p47 = scmp.ne.s32.totalorder %s33, %s34
      %p48 = scmp.eq.s32.totalorder %s26, 1
      %p49 = por %p47, %p48
      %p51 = scmp.ne.s32.totalorder %s34, %s50
      %p52 = scmp.eq.s32.totalorder %s26, 0
      %p53 = por %p51, %p52
      %s55 = sadd.s32 %s54, 1
      %p58 = scmp.eq.s32.totalorder %s20, 1
      %p59 = scmp.ne.s32.totalorder %s54, %s56
      %p60 = scmp.eq.s32.totalorder %s20, 0
      %p61 = por %p59, %p60
      %p62 = scmp.ne.s32.totalorder %s54, %s56
      %p63 = scmp.eq.s32.totalorder %s25, 1
      %p64 = por %p62, %p63
      %p65 = scmp.ne.s32.totalorder %s56, %s57
      %p66 = scmp.eq.s32.totalorder %s25, 0
      %p67 = por %p65, %p66
      %p68 = scmp.ne.s32.totalorder %s56, %s57
      %p69 = scmp.eq.s32.totalorder %s26, 1
      %p70 = por %p68, %p69
      %p72 = scmp.ne.s32.totalorder %s57, %s71
      %p73 = scmp.eq.s32.totalorder %s26, 0
      %p74 = por %p72, %p73
      %s76 = sadd.s32 %s75, 1
      %p79 = scmp.eq.s32.totalorder %s20, 1
      %p80 = scmp.ne.s32.totalorder %s75, %s77
      %p81 = scmp.eq.s32.totalorder %s20, 0
      %p82 = por %p80, %p81
      %p83 = scmp.ne.s32.totalorder %s75, %s77
      %p84 = scmp.eq.s32.totalorder %s25, 1
      %p85 = por %p83, %p84
      %p86 = scmp.ne.s32.totalorder %s77, %s78
      %p87 = scmp.eq.s32.totalorder %s25, 0
      %p88 = por %p86, %p87
      %p89 = scmp.ne.s32.totalorder %s77, %s78
      %p90 = scmp.eq.s32.totalorder %s26, 1
      %p91 = por %p89, %p90
      %p93 = scmp.ne.s32.totalorder %s78, %s92
      %p94 = scmp.eq.s32.totalorder %s26, 0
      %p95 = por %p93, %p94
      %s97 = sadd.s32 %s96, 1
      %p100 = scmp.eq.s32.totalorder %s20, 1
      %p101 = scmp.ne.s32.totalorder %s96, %s98
      %p102 = scmp.eq.s32.totalorder %s20, 0
      %p103 = por %p101, %p102
      %p104 = scmp.ne.s32.totalorder %s96, %s98
      %p105 = scmp.eq.s32.totalorder %s25, 1
      %p106 = por %p104, %p105
      %p107 = scmp.ne.s32.totalorder %s98, %s99
      %p108 = scmp.eq.s32.totalorder %s25, 0
      %p109 = por %p107, %p108
      %p110 = scmp.ne.s32.totalorder %s98, %s99
      %p111 = scmp.eq.s32.totalorder %s26, 1
      %p112 = por %p110, %p111
      %p114 = scmp.ne.s32.totalorder %s99, %s113
      %p115 = scmp.eq.s32.totalorder %s26, 0
      %p116 = por %p114, %p115
      %s118 = sadd.s32 %s117, 1
      %p121 = scmp.eq.s32.totalorder %s20, 1
      %p122 = scmp.ne.s32.totalorder %s117, %s119
      %p123 = scmp.eq.s32.totalorder %s20, 0
      %p124 = por %p122, %p123
      %p125 = scmp.ne.s32.totalorder %s117, %s119
      %p126 = scmp.eq.s32.totalorder %s25, 1
      %p127 = por %p125, %p126
      %p128 = scmp.ne.s32.totalorder %s119, %s120
      %p129 = scmp.eq.s32.totalorder %s25, 0
      %p130 = por %p128, %p129
      %p131 = scmp.ne.s32.totalorder %s119, %s120
      %p132 = scmp.eq.s32.totalorder %s26, 1
      %p133 = por %p131, %p132
      %p135 = scmp.ne.s32.totalorder %s120, %s134
      %p136 = scmp.eq.s32.totalorder %s26, 0
      %p137 = por %p135, %p136
      %s139 = sadd.s32 %s138, 1
      %p142 = scmp.eq.s32.totalorder %s20, 1
      %p143 = scmp.ne.s32.totalorder %s138, %s140
      %p144 = scmp.eq.s32.totalorder %s20, 0
      %p145 = por %p143, %p144
      %p146 = scmp.ne.s32.totalorder %s138, %s140
      %p147 = scmp.eq.s32.totalorder %s25, 1
      %p148 = por %p146, %p147
      %p149 = scmp.ne.s32.totalorder %s140, %s141
      %p150 = scmp.eq.s32.totalorder %s25, 0
      %p151 = por %p149, %p150
      %p152 = scmp.ne.s32.totalorder %s140, %s141
      %p153 = scmp.eq.s32.totalorder %s26, 1
      %p154 = por %p152, %p153
      %p156 = scmp.ne.s32.totalorder %s141, %s155
      %p157 = scmp.eq.s32.totalorder %s26, 0
      %p158 = por %p156, %p157
      %s160 = sadd.s32 %s159, 1
      %p163 = scmp.eq.s32.totalorder %s20, 1
      %p164 = scmp.ne.s32.totalorder %s159, %s161
      %p165 = scmp.eq.s32.totalorder %s20, 0
      %p166 = por %p164, %p165
      %p167 = scmp.ne.s32.totalorder %s159, %s161
      %p168 = scmp.eq.s32.totalorder %s25, 1
      %p169 = por %p167, %p168
      %p170 = scmp.ne.s32.totalorder %s161, %s162
      %p171 = scmp.eq.s32.totalorder %s25, 0
      %p172 = por %p170, %p171
      %p173 = scmp.ne.s32.totalorder %s161, %s162
      %p174 = scmp.eq.s32.totalorder %s26, 1
      %p175 = por %p173, %p174
      %p177 = scmp.ne.s32.totalorder %s162, %s176
      %p178 = scmp.eq.s32.totalorder %s26, 0
      %p179 = por %p177, %p178
      %s181 = sadd.s32 %s180, 1
      %p184 = scmp.eq.s32.totalorder %s20, 1
      %p185 = scmp.ne.s32.totalorder %s180, %s182
      %p186 = scmp.eq.s32.totalorder %s20, 0
      %p187 = por %p185, %p186
      %p188 = scmp.ne.s32.totalorder %s180, %s182
      %p189 = scmp.eq.s32.totalorder %s25, 1
      %p190 = por %p188, %p189
      %p191 = scmp.ne.s32.totalorder %s182, %s183
      %p192 = scmp.eq.s32.totalorder %s25, 0
      %p193 = por %p191, %p192
      %p194 = scmp.ne.s32.totalorder %s182, %s183
      %p195 = scmp.eq.s32.totalorder %s26, 1
      %p196 = por %p194, %p195
      %p198 = scmp.ne.s32.totalorder %s183, %s197
      %p199 = scmp.eq.s32.totalorder %s26, 0
      %p200 = por %p198, %p199
      %s202 = sadd.s32 %s201, 1
      %p205 = scmp.eq.s32.totalorder %s20, 1
      %p206 = scmp.ne.s32.totalorder %s201, %s203
      %p207 = scmp.eq.s32.totalorder %s20, 0
      %p208 = por %p206, %p207
      %p209 = scmp.ne.s32.totalorder %s201, %s203
      %p210 = scmp.eq.s32.totalorder %s25, 1
      %p211 = por %p209, %p210
      %p212 = scmp.ne.s32.totalorder %s203, %s204
      %p213 = scmp.eq.s32.totalorder %s25, 0
      %p214 = por %p212, %p213
      %p215 = scmp.ne.s32.totalorder %s203, %s204
      %p216 = scmp.eq.s32.totalorder %s26, 1
      %p217 = por %p215, %p216
      %p219 = scmp.ne.s32.totalorder %s204, %s218
      %p220 = scmp.eq.s32.totalorder %s26, 0
      %p221 = por %p219, %p220
      %s223 = sadd.s32 %s222, 1
      %p226 = scmp.eq.s32.totalorder %s20, 1
      %p227 = scmp.ne.s32.totalorder %s222, %s224
      %p228 = scmp.eq.s32.totalorder %s20, 0
      %p229 = por %p227, %p228
      %p230 = scmp.ne.s32.totalorder %s222, %s224
      %p231 = scmp.eq.s32.totalorder %s25, 1
      %p232 = por %p230, %p231
      %p233 = scmp.ne.s32.totalorder %s224, %s225
      %p234 = scmp.eq.s32.totalorder %s25, 0
      %p235 = por %p233, %p234
      %p236 = scmp.ne.s32.totalorder %s224, %s225
      %p237 = scmp.eq.s32.totalorder %s26, 1
      %p238 = por %p236, %p237
      %p240 = scmp.ne.s32.totalorder %s225, %s239
      %p241 = scmp.eq.s32.totalorder %s26, 0
      %p242 = por %p240, %p241
      %s243 = ssub.s32 %s20, %s27
      %p244 = scmp.eq.s32.totalorder %s243, 0
      %s246 = sadd.s32 %s245, 1
      %s247 = scalar_select %p244, %s245, %s246
      %p250 = pneg %p244
      %p251 = scmp.eq.s32.totalorder %s20, 1
      %p252 = por %p250, %p251
      %p253 = scmp.ne.s32.totalorder %s245, %s248
      %p254 = scmp.eq.s32.totalorder %s20, 0
      %p255 = por %p253, %p254
      %p256 = scmp.ne.s32.totalorder %s245, %s248
      %p257 = scmp.eq.s32.totalorder %s25, 1
      %p258 = por %p256, %p257
      %p259 = scmp.ne.s32.totalorder %s248, %s249
      %p260 = scmp.eq.s32.totalorder %s25, 0
      %p261 = por %p259, %p260
      %p262 = scmp.ne.s32.totalorder %s248, %s249
      %p263 = scmp.eq.s32.totalorder %s26, 1
      %p264 = por %p262, %p263
      %p266 = scmp.ne.s32.totalorder %s249, %s265
      %p267 = scmp.eq.s32.totalorder %s26, 0
      %p268 = por %p266, %p267
      %p269 = scmp.le.s32.totalorder 1, %s20
      %p270 = scmp.lt.s32.totalorder %s20, 3
      %p271 = pnand %p269, %p270
      %p272 = pneg %p271
      // Predicated region
      $region9: #{wide_and_deep_forward.1} parent=5 // pred_check
        _
      $region10: #{wide_and_deep_forward.1} parent=5 // pred_check_branch
        %274 = sbr.rel (%p271) target = $region12
      $region11: #{wide_and_deep_forward.1} parent=5 // pred_region
        %s275 = ssub.s32 %s20, 1
        // Predicated region
        $region13: #{wide_and_deep_forward.1} parent=11 // pred_check
          %p276 = pneg %p67
        $region14: #{wide_and_deep_forward.1} parent=11 // pred_check_branch
          %278 = sbr.rel (%p276) target = $region16
        $region15: #{wide_and_deep_forward.1} parent=11 // pred_region
          _
        $region16: #{wide_and_deep_forward.1} parent=11 // pred_fallthru
          _
        // Predicated region
        $region17: #{wide_and_deep_forward.1} parent=11 // pred_check
          %p279 = pneg %p88
        $region18: #{wide_and_deep_forward.1} parent=11 // pred_check_branch
          %281 = sbr.rel (%p279) target = $region20
        $region19: #{wide_and_deep_forward.1} parent=11 // pred_region
          _
        $region20: #{wide_and_deep_forward.1} parent=11 // pred_fallthru
          _
        // Predicated region
        $region21: #{wide_and_deep_forward.1} parent=11 // pred_check
          %p282 = pneg %p109
        $region22: #{wide_and_deep_forward.1} parent=11 // pred_check_branch
          %284 = sbr.rel (%p282) target = $region24
        $region23: #{wide_and_deep_forward.1} parent=11 // pred_region
          _
        $region24: #{wide_and_deep_forward.1} parent=11 // pred_fallthru
          _
        // Predicated region
        $region25: #{wide_and_deep_forward.1} parent=11 // pred_check
          %p285 = pneg %p130
        $region26: #{wide_and_deep_forward.1} parent=11 // pred_check_branch
          %287 = sbr.rel (%p285) target = $region28
        $region27: #{wide_and_deep_forward.1} parent=11 // pred_region
          _
        $region28: #{wide_and_deep_forward.1} parent=11 // pred_fallthru
          _
        // Predicated region
        $region29: #{wide_and_deep_forward.1} parent=11 // pred_check
          %p288 = pneg %p151
        $region30: #{wide_and_deep_forward.1} parent=11 // pred_check_branch
          %290 = sbr.rel (%p288) target = $region32
        $region31: #{wide_and_deep_forward.1} parent=11 // pred_region
          _
        $region32: #{wide_and_deep_forward.1} parent=11 // pred_fallthru
          _
        // Predicated region
        $region33: #{wide_and_deep_forward.1} parent=11 // pred_check
          %p291 = pneg %p172
        $region34: #{wide_and_deep_forward.1} parent=11 // pred_check_branch
          %293 = sbr.rel (%p291) target = $region36
        $region35: #{wide_and_deep_forward.1} parent=11 // pred_region
          _
        $region36: #{wide_and_deep_forward.1} parent=11 // pred_fallthru
          _
        // Predicated region
        $region37: #{wide_and_deep_forward.1} parent=11 // pred_check
          %p294 = pneg %p193
        $region38: #{wide_and_deep_forward.1} parent=11 // pred_check_branch
          %296 = sbr.rel (%p294) target = $region40
        $region39: #{wide_and_deep_forward.1} parent=11 // pred_region
          _
        $region40: #{wide_and_deep_forward.1} parent=11 // pred_fallthru
          _
        // Predicated region
        $region41: #{wide_and_deep_forward.1} parent=11 // pred_check
          %p297 = pneg %p214
        $region42: #{wide_and_deep_forward.1} parent=11 // pred_check_branch
          %299 = sbr.rel (%p297) target = $region44
        $region43: #{wide_and_deep_forward.1} parent=11 // pred_region
          _
        $region44: #{wide_and_deep_forward.1} parent=11 // pred_fallthru
          _
        // Predicated region
        $region45: #{wide_and_deep_forward.1} parent=11 // pred_check
          %p300 = pneg %p235
        $region46: #{wide_and_deep_forward.1} parent=11 // pred_check_branch
          %302 = sbr.rel (%p300) target = $region48
        $region47: #{wide_and_deep_forward.1} parent=11 // pred_region
          _
        $region48: #{wide_and_deep_forward.1} parent=11 // pred_fallthru
          _
      $region12: #{wide_and_deep_forward.1} parent=5 // pred_fallthru
        _
      %p303 = scmp.lt.s32.totalorder %s20, 2
      // Predicated region
      $region49: #{wide_and_deep_forward.1} parent=5 // pred_check
        %p304 = pneg %p303
      $region50: #{wide_and_deep_forward.1} parent=5 // pred_check_branch
        %306 = sbr.rel (%p304) target = $region52
      $region51: #{wide_and_deep_forward.1} parent=5 // pred_region
        // Predicated region
        $region53: #{wide_and_deep_forward.1} parent=51 // pred_check
          %p307 = pneg %p40
        $region54: #{wide_and_deep_forward.1} parent=51 // pred_check_branch
          %309 = sbr.rel (%p307) target = $region56
        $region55: #{wide_and_deep_forward.1} parent=51 // pred_region
          %s310 = smul.u32 32, %s20
          %p311 = scmp.lt.s32.totalorder %s310, 63
          %s312 = scalar_select %p311, %s310, 63
          %s313 = smul.addr %s312, 4
          %s314 = scalar_lea.vmem %s0, %s313
          %s315 = smul.u32 32, %s20
        $region56: #{wide_and_deep_forward.1} parent=51 // pred_fallthru
          _
      $region52: #{wide_and_deep_forward.1} parent=5 // pred_fallthru
        _
      %p316 = scmp.le.s32.totalorder 1, %s20
      %p317 = scmp.lt.s32.totalorder %s20, 3
      %p318 = pnand %p316, %p317
      %p319 = pneg %p318
      // Predicated region
      $region57: #{wide_and_deep_forward.1} parent=5 // pred_check
        _
      $region58: #{wide_and_deep_forward.1} parent=5 // pred_check_branch
        %321 = sbr.rel (%p318) target = $region60
      $region59: #{wide_and_deep_forward.1} parent=5 // pred_region
        %s322 = ssub.s32 %s20, 1
        %s323 = smul.u32 32, %s25
        %p324 = scmp.lt.s32.totalorder %s323, 63
        %s325 = scalar_select %p324, %s323, 63
        %s326 = smul.addr %s325, 4
        %s327 = scalar_lea.vmem %s0, %s326
        %p328 = pneg %p46
        %p329 = pneg %p43
        %p330 = pneg %p67
        %p331 = pneg %p64
        %p332 = pneg %p88
        %p333 = pneg %p85
        %p334 = pneg %p109
        %p335 = pneg %p106
        %p336 = pneg %p130
        %p337 = pneg %p127
        %p338 = pneg %p151
        %p339 = pneg %p148
        %p340 = pneg %p172
        %p341 = pneg %p169
        %p342 = pneg %p193
        %p343 = pneg %p190
        %p344 = pneg %p214
        %p345 = pneg %p211
        %p346 = pneg %p235
        %p347 = pneg %p232
        %p348 = pneg %p261
        %p349 = pneg %p258
        %s350 = sand.u32 %s248, 1
        %s351 = scalar_lea.sflag [#allocation4], %s350
        %s352 = sand.u32 %s248, 1
        %s353 = smul.addr %s352, 2
        %s354 = scalar_lea.vmem [#allocation3], %s353
        %s355 = smul.u32 32, %s25
        %p356 = scmp.lt.s32.totalorder %s355, 63
        %s357 = scalar_select %p356, %s355, 63
        %s358 = smul.addr %s357, 4
        %s359 = scalar_lea.vmem %s0, %s358
        %s360 = smul.u32 32, %s25
        %v362 = vld [vmem:[%s359] sm:$0xf]
        %v363 = vld [vmem:[%s359 + $0x4] sm:$0xf]
        %v364 = vld [vmem:[%s359 + $0x8] sm:$0xf]
        %v365 = vld [vmem:[%s359 + $0xc] sm:$0xf]
        %v366 = vld [vmem:[%s359 + $0x10] sm:$0xf]
        %v367 = vld [vmem:[%s359 + $0x14] sm:$0xf]
        %v368 = vld [vmem:[%s359 + $0x18] sm:$0xf]
        %v369 = vld [vmem:[%s359 + $0x1c] sm:$0xf]
        %v370 = vld [vmem:[%s359 + $0x20] sm:$0xf]
        %v371 = vld [vmem:[%s359 + $0x24] sm:$0xf]
        %v372 = vld [vmem:[%s359 + $0x28] sm:$0xf]
        %v373 = vld [vmem:[%s359 + $0x2c] sm:$0xf]
        %v374 = vld [vmem:[%s359 + $0x30] sm:$0xf]
        %v375 = vld [vmem:[%s359 + $0x34] sm:$0xf]
        %v376 = vld [vmem:[%s359 + $0x38] sm:$0xf]
        %v377 = vld [vmem:[%s359 + $0x3c] sm:$0xf]
        %v378 = vld [vmem:[%s359 + $0x40] sm:$0xf]
        %v379 = vld [vmem:[%s359 + $0x44] sm:$0xf]
        %v380 = vld [vmem:[%s359 + $0x48] sm:$0xf]
        %v381 = vld [vmem:[%s359 + $0x4c] sm:$0xf]
        %v382 = vld [vmem:[%s359 + $0x50] sm:$0xf]
        %v383 = vld [vmem:[%s359 + $0x54] sm:$0xf]
        %v384 = vld [vmem:[%s359 + $0x58] sm:$0xf]
        %v385 = vld [vmem:[%s359 + $0x5c] sm:$0xf]
        %v386 = vld [vmem:[%s359 + $0x60] sm:$0xf]
        %v387 = vld [vmem:[%s359 + $0x64] sm:$0xf]
        %v388 = vld [vmem:[%s359 + $0x68] sm:$0xf]
        %v389 = vld [vmem:[%s359 + $0x6c] sm:$0xf]
        %v390 = vld [vmem:[%s359 + $0x70] sm:$0xf]
        %v391 = vld [vmem:[%s359 + $0x74] sm:$0xf]
        %v392 = vld [vmem:[%s359 + $0x78] sm:$0xf]
        %v393 = vld [vmem:[%s359 + $0x7c] sm:$0xf]
        %v394 = vld [vmem:[%s1] sm:$0xff]
        %v395 = vld [vmem:[%s1 + $0x8] sm:$0xff]
        %v396 = vld [vmem:[%s1 + $0x10] sm:$0xff]
        %v397 = vld [vmem:[%s1 + $0x18] sm:$0xff]
        %v398 = vld [vmem:[%s1 + $0x20] sm:$0xff]
        %v399 = vld [vmem:[%s1 + $0x28] sm:$0xff]
        %v400 = vld [vmem:[%s2] sm:$0x3]
        %v402 = vperm.slane %v400, 0
        %v403 = vperm.slane %v400, 1
        %v438 = vunpack.c.l.b16 %v362
        %v439 = vunpack.c.l.b16 %v363
        %v440 = vunpack.c.l.b16 %v364
        %v441 = vunpack.c.l.b16 %v365
        %v442 = vunpack.c.l.b16 %v366
        %v443 = vunpack.c.l.b16 %v367
        %v444 = vunpack.c.l.b16 %v368
        %v445 = vunpack.c.l.b16 %v369
        %v446 = vunpack.c.l.b16 %v370
        %v447 = vunpack.c.l.b16 %v371
        %v448 = vunpack.c.l.b16 %v372
        %v449 = vunpack.c.l.b16 %v373
        %v450 = vunpack.c.l.b16 %v374
        %v451 = vunpack.c.l.b16 %v375
        %v452 = vunpack.c.l.b16 %v376
        %v453 = vunpack.c.l.b16 %v377
        %v454 = vunpack.c.l.b16 %v378
        %v455 = vunpack.c.l.b16 %v379
        %v456 = vunpack.c.l.b16 %v380
        %v457 = vunpack.c.l.b16 %v381
        %v458 = vunpack.c.l.b16 %v382
        %v459 = vunpack.c.l.b16 %v383
        %v460 = vunpack.c.l.b16 %v384
        %v461 = vunpack.c.l.b16 %v385
        %v462 = vunpack.c.l.b16 %v386
        %v463 = vunpack.c.l.b16 %v387
        %v464 = vunpack.c.l.b16 %v388
        %v465 = vunpack.c.l.b16 %v389
        %v466 = vunpack.c.l.b16 %v390
        %v467 = vunpack.c.l.b16 %v391
        %v468 = vunpack.c.l.b16 %v392
        %v469 = vunpack.c.l.b16 %v393
        %v470 = vpack.c.b16 %v439, %v438
        %v471 = vpack.c.b16 %v441, %v440
        %v472 = vpack.c.b16 %v443, %v442
        %v473 = vpack.c.b16 %v445, %v444
        %v474 = vpack.c.b16 %v447, %v446
        %v475 = vpack.c.b16 %v449, %v448
        %v476 = vpack.c.b16 %v451, %v450
        %v477 = vpack.c.b16 %v453, %v452
        %v478 = vpack.c.b16 %v455, %v454
        %v479 = vpack.c.b16 %v457, %v456
        %v480 = vpack.c.b16 %v459, %v458
        %v481 = vpack.c.b16 %v461, %v460
        %v482 = vpack.c.b16 %v463, %v462
        %v483 = vpack.c.b16 %v465, %v464
        %v484 = vpack.c.b16 %v467, %v466
        %v485 = vpack.c.b16 %v469, %v468
        %v492 = vunpack.c.l.b16 %v394
        %v493 = vunpack.c.h.b16 %v394
        %v494 = vunpack.c.l.b16 %v395
        %v495 = vunpack.c.h.b16 %v395
        %v496 = vunpack.c.l.b16 %v396
        %v497 = vunpack.c.h.b16 %v396
        %v498 = vunpack.c.l.b16 %v397
        %v499 = vunpack.c.h.b16 %v397
        %v500 = vunpack.c.l.b16 %v398
        %v501 = vunpack.c.h.b16 %v398
        %v502 = vunpack.c.l.b16 %v399
        %v503 = vunpack.c.h.b16 %v399
        %v504 = vpack.c.b16 %v494, %v492
        %v505 = vpack.c.b16 %v495, %v493
        %v506 = vpack.c.b16 %v498, %v496
        %v507 = vpack.c.b16 %v499, %v497
        %v508 = vpack.c.b16 %v502, %v500
        %v509 = vpack.c.b16 %v503, %v501
        %vm516 = vcmask 392192
        %v518 = vsel %vm516, %v470, 0
        %v521 = vsel %vm516, %v471, 0
        %v524 = vsel %vm516, %v472, 0
        %v527 = vsel %vm516, %v473, 0
        %v530 = vsel %vm516, %v474, 0
        %v533 = vsel %vm516, %v475, 0
        %v536 = vsel %vm516, %v476, 0
        %v539 = vsel %vm516, %v477, 0
        %v542 = vsel %vm516, %v478, 0
        %v545 = vsel %vm516, %v479, 0
        %v548 = vsel %vm516, %v480, 0
        %v551 = vsel %vm516, %v481, 0
        %v554 = vsel %vm516, %v482, 0
        %v557 = vsel %vm516, %v483, 0
        %v560 = vsel %vm516, %v484, 0
        %v563 = vsel %vm516, %v485, 0
        %565 = vmatpush.bf16.msra.mxu0 0
        %566 = vmatpush.bf16.msra.mxu0 0
        %567 = vmatpush.bf16.msra.mxu0 0
        %568 = vmatpush.bf16.msra.mxu0 0
        %569 = vmatpush.bf16.msra.mxu0 0
        %570 = vmatpush.bf16.msra.mxu0 %v508
        %571 = vmatpush.bf16.msra.mxu0 %v506
        %572 = vmatpush.bf16.msra.mxu0 %v504
        %573 = vmatmul.bf16.gmra.mxu0 %v518
        %v574 = vpop.f32.mrf.mxu0
        %v575 = vadd.f32 %v402, %v574
        %v576 = vpop.f32.mrf.mxu0
        %v577 = vadd.f32 %v402, %v576
        %578 = vmatmul.bf16.gmra.mxu0 %v521
        %v579 = vpop.f32.mrf.mxu0
        %v580 = vadd.f32 %v402, %v579
        %v581 = vpop.f32.mrf.mxu0
        %v582 = vadd.f32 %v402, %v581
        %583 = vmatmul.bf16.gmra.mxu0 %v524
        %v584 = vpop.f32.mrf.mxu0
        %v585 = vadd.f32 %v402, %v584
        %v586 = vpop.f32.mrf.mxu0
        %v587 = vadd.f32 %v402, %v586
        %588 = vmatmul.bf16.gmra.mxu0 %v527
        %v589 = vpop.f32.mrf.mxu0
        %v590 = vadd.f32 %v402, %v589
        %v591 = vpop.f32.mrf.mxu0
        %v592 = vadd.f32 %v402, %v591
        %593 = vmatmul.bf16.gmra.mxu0 %v530
        %v594 = vpop.f32.mrf.mxu0
        %v595 = vadd.f32 %v402, %v594
        %v596 = vpop.f32.mrf.mxu0
        %v597 = vadd.f32 %v402, %v596
        %598 = vmatmul.bf16.gmra.mxu0 %v533
        %v599 = vpop.f32.mrf.mxu0
        %v600 = vadd.f32 %v402, %v599
        %v601 = vpop.f32.mrf.mxu0
        %v602 = vadd.f32 %v402, %v601
        %603 = vmatmul.bf16.gmra.mxu0 %v536
        %v604 = vpop.f32.mrf.mxu0
        %v605 = vadd.f32 %v402, %v604
        %v606 = vpop.f32.mrf.mxu0
        %v607 = vadd.f32 %v402, %v606
        %608 = vmatmul.bf16.gmra.mxu0 %v539
        %v609 = vpop.f32.mrf.mxu0
        %v610 = vadd.f32 %v402, %v609
        %v611 = vpop.f32.mrf.mxu0
        %v612 = vadd.f32 %v402, %v611
        %613 = vmatmul.bf16.gmra.mxu0 %v542
        %v614 = vpop.f32.mrf.mxu0
        %v615 = vadd.f32 %v402, %v614
        %v616 = vpop.f32.mrf.mxu0
        %v617 = vadd.f32 %v402, %v616
        %618 = vmatmul.bf16.gmra.mxu0 %v545
        %v619 = vpop.f32.mrf.mxu0
        %v620 = vadd.f32 %v402, %v619
        %v621 = vpop.f32.mrf.mxu0
        %v622 = vadd.f32 %v402, %v621
        %623 = vmatmul.bf16.gmra.mxu0 %v548
        %v624 = vpop.f32.mrf.mxu0
        %v625 = vadd.f32 %v402, %v624
        %v626 = vpop.f32.mrf.mxu0
        %v627 = vadd.f32 %v402, %v626
        %628 = vmatmul.bf16.gmra.mxu0 %v551
        %v629 = vpop.f32.mrf.mxu0
        %v630 = vadd.f32 %v402, %v629
        %v631 = vpop.f32.mrf.mxu0
        %v632 = vadd.f32 %v402, %v631
        %633 = vmatmul.bf16.gmra.mxu0 %v554
        %v634 = vpop.f32.mrf.mxu0
        %v635 = vadd.f32 %v402, %v634
        %v636 = vpop.f32.mrf.mxu0
        %v637 = vadd.f32 %v402, %v636
        %638 = vmatmul.bf16.gmra.mxu0 %v557
        %v639 = vpop.f32.mrf.mxu0
        %v640 = vadd.f32 %v402, %v639
        %v641 = vpop.f32.mrf.mxu0
        %v642 = vadd.f32 %v402, %v641
        %643 = vmatmul.bf16.gmra.mxu0 %v560
        %v644 = vpop.f32.mrf.mxu0
        %v645 = vadd.f32 %v402, %v644
        %v646 = vpop.f32.mrf.mxu0
        %v647 = vadd.f32 %v402, %v646
        %648 = vmatmul.bf16.gmra.mxu0 %v563
        %v649 = vpop.f32.mrf.mxu0
        %v650 = vadd.f32 %v402, %v649
        %v651 = vpop.f32.mrf.mxu0
        %v652 = vadd.f32 %v402, %v651
        %653 = vdwg.mxu0
        %654 = vmatpush.bf16.msra.mxu0 0
        %655 = vmatpush.bf16.msra.mxu0 0
        %656 = vmatpush.bf16.msra.mxu0 0
        %657 = vmatpush.bf16.msra.mxu0 0
        %658 = vmatpush.bf16.msra.mxu0 0
        %659 = vmatpush.bf16.msra.mxu0 %v509
        %660 = vmatpush.bf16.msra.mxu0 %v507
        %661 = vmatpush.bf16.msra.mxu0 %v505
        %662 = vmatmul.bf16.gmra.mxu0 %v518
        %v663 = vpop.f32.mrf.mxu0
        %v664 = vadd.f32 %v403, %v663
        %v665 = vpop.f32.mrf.mxu0
        %v666 = vadd.f32 %v403, %v665
        %667 = vmatmul.bf16.gmra.mxu0 %v521
        %v668 = vpop.f32.mrf.mxu0
        %v669 = vadd.f32 %v403, %v668
        %v670 = vpop.f32.mrf.mxu0
        %v671 = vadd.f32 %v403, %v670
        %672 = vmatmul.bf16.gmra.mxu0 %v524
        %v673 = vpop.f32.mrf.mxu0
        %v674 = vadd.f32 %v403, %v673
        %v675 = vpop.f32.mrf.mxu0
        %v676 = vadd.f32 %v403, %v675
        %677 = vmatmul.bf16.gmra.mxu0 %v527
        %v678 = vpop.f32.mrf.mxu0
        %v679 = vadd.f32 %v403, %v678
        %v680 = vpop.f32.mrf.mxu0
        %v681 = vadd.f32 %v403, %v680
        %682 = vmatmul.bf16.gmra.mxu0 %v530
        %v683 = vpop.f32.mrf.mxu0
        %v684 = vadd.f32 %v403, %v683
        %v685 = vpop.f32.mrf.mxu0
        %v686 = vadd.f32 %v403, %v685
        %687 = vmatmul.bf16.gmra.mxu0 %v533
        %v688 = vpop.f32.mrf.mxu0
        %v689 = vadd.f32 %v403, %v688
        %v690 = vpop.f32.mrf.mxu0
        %v691 = vadd.f32 %v403, %v690
        %692 = vmatmul.bf16.gmra.mxu0 %v536
        %v693 = vpop.f32.mrf.mxu0
        %v694 = vadd.f32 %v403, %v693
        %v695 = vpop.f32.mrf.mxu0
        %v696 = vadd.f32 %v403, %v695
        %697 = vmatmul.bf16.gmra.mxu0 %v539
        %v698 = vpop.f32.mrf.mxu0
        %v699 = vadd.f32 %v403, %v698
        %v700 = vpop.f32.mrf.mxu0
        %v701 = vadd.f32 %v403, %v700
        %702 = vmatmul.bf16.gmra.mxu0 %v542
        %v703 = vpop.f32.mrf.mxu0
        %v704 = vadd.f32 %v403, %v703
        %v705 = vpop.f32.mrf.mxu0
        %v706 = vadd.f32 %v403, %v705
        %707 = vmatmul.bf16.gmra.mxu0 %v545
        %v708 = vpop.f32.mrf.mxu0
        %v709 = vadd.f32 %v403, %v708
        %v710 = vpop.f32.mrf.mxu0
        %v711 = vadd.f32 %v403, %v710
        %712 = vmatmul.bf16.gmra.mxu0 %v548
        %v713 = vpop.f32.mrf.mxu0
        %v714 = vadd.f32 %v403, %v713
        %v715 = vpop.f32.mrf.mxu0
        %v716 = vadd.f32 %v403, %v715
        %717 = vmatmul.bf16.gmra.mxu0 %v551
        %v718 = vpop.f32.mrf.mxu0
        %v719 = vadd.f32 %v403, %v718
        %v720 = vpop.f32.mrf.mxu0
        %v721 = vadd.f32 %v403, %v720
        %722 = vmatmul.bf16.gmra.mxu0 %v554
        %v723 = vpop.f32.mrf.mxu0
        %v724 = vadd.f32 %v403, %v723
        %v725 = vpop.f32.mrf.mxu0
        %v726 = vadd.f32 %v403, %v725
        %727 = vmatmul.bf16.gmra.mxu0 %v557
        %v728 = vpop.f32.mrf.mxu0
        %v729 = vadd.f32 %v403, %v728
        %v730 = vpop.f32.mrf.mxu0
        %v731 = vadd.f32 %v403, %v730
        %732 = vmatmul.bf16.gmra.mxu0 %v560
        %v733 = vpop.f32.mrf.mxu0
        %v734 = vadd.f32 %v403, %v733
        %v735 = vpop.f32.mrf.mxu0
        %v736 = vadd.f32 %v403, %v735
        %737 = vmatmul.bf16.gmra.mxu0 %v563
        %v738 = vpop.f32.mrf.mxu0
        %v739 = vadd.f32 %v403, %v738
        %v740 = vpop.f32.mrf.mxu0
        %v741 = vadd.f32 %v403, %v740
        %742 = vdwg.mxu0
        %v743 = vmax.f32 %v575, 0.0
        %v744 = vmax.f32 %v664, 0.0
        %v745 = vmax.f32 %v577, 0.0
        %v746 = vmax.f32 %v666, 0.0
        %v747 = vmax.f32 %v580, 0.0
        %v748 = vmax.f32 %v669, 0.0
        %v749 = vmax.f32 %v582, 0.0
        %v750 = vmax.f32 %v671, 0.0
        %v751 = vmax.f32 %v585, 0.0
        %v752 = vmax.f32 %v674, 0.0
        %v753 = vmax.f32 %v587, 0.0
        %v754 = vmax.f32 %v676, 0.0
        %v755 = vmax.f32 %v590, 0.0
        %v756 = vmax.f32 %v679, 0.0
        %v757 = vmax.f32 %v592, 0.0
        %v758 = vmax.f32 %v681, 0.0
        %v759 = vmax.f32 %v595, 0.0
        %v760 = vmax.f32 %v684, 0.0
        %v761 = vmax.f32 %v597, 0.0
        %v762 = vmax.f32 %v686, 0.0
        %v763 = vmax.f32 %v600, 0.0
        %v764 = vmax.f32 %v689, 0.0
        %v765 = vmax.f32 %v602, 0.0
        %v766 = vmax.f32 %v691, 0.0
        %v767 = vmax.f32 %v605, 0.0
        %v768 = vmax.f32 %v694, 0.0
        %v769 = vmax.f32 %v607, 0.0
        %v770 = vmax.f32 %v696, 0.0
        %v771 = vmax.f32 %v610, 0.0
        %v772 = vmax.f32 %v699, 0.0
        %v773 = vmax.f32 %v612, 0.0
        %v774 = vmax.f32 %v701, 0.0
        %v775 = vmax.f32 %v615, 0.0
        %v776 = vmax.f32 %v704, 0.0
        %v777 = vmax.f32 %v617, 0.0
        %v778 = vmax.f32 %v706, 0.0
        %v779 = vmax.f32 %v620, 0.0
        %v780 = vmax.f32 %v709, 0.0
        %v781 = vmax.f32 %v622, 0.0
        %v782 = vmax.f32 %v711, 0.0
        %v783 = vmax.f32 %v625, 0.0
        %v784 = vmax.f32 %v714, 0.0
        %v785 = vmax.f32 %v627, 0.0
        %v786 = vmax.f32 %v716, 0.0
        %v787 = vmax.f32 %v630, 0.0
        %v788 = vmax.f32 %v719, 0.0
        %v789 = vmax.f32 %v632, 0.0
        %v790 = vmax.f32 %v721, 0.0
        %v791 = vmax.f32 %v635, 0.0
        %v792 = vmax.f32 %v724, 0.0
        %v793 = vmax.f32 %v637, 0.0
        %v794 = vmax.f32 %v726, 0.0
        %v795 = vmax.f32 %v640, 0.0
        %v796 = vmax.f32 %v729, 0.0
        %v797 = vmax.f32 %v642, 0.0
        %v798 = vmax.f32 %v731, 0.0
        %v799 = vmax.f32 %v645, 0.0
        %v800 = vmax.f32 %v734, 0.0
        %v801 = vmax.f32 %v647, 0.0
        %v802 = vmax.f32 %v736, 0.0
        %v803 = vmax.f32 %v650, 0.0
        %v804 = vmax.f32 %v739, 0.0
        %v805 = vmax.f32 %v652, 0.0
        %v806 = vmax.f32 %v741, 0.0
        %v807 = vpack.c.bf16 %v745, %v743
        %v808 = vpack.c.bf16 %v746, %v744
        %v809 = vpack.c.bf16 %v749, %v747
        %v810 = vpack.c.bf16 %v750, %v748
        %v811 = vpack.c.bf16 %v753, %v751
        %v812 = vpack.c.bf16 %v754, %v752
        %v813 = vpack.c.bf16 %v757, %v755
        %v814 = vpack.c.bf16 %v758, %v756
        %v815 = vpack.c.bf16 %v761, %v759
        %v816 = vpack.c.bf16 %v762, %v760
        %v817 = vpack.c.bf16 %v765, %v763
        %v818 = vpack.c.bf16 %v766, %v764
        %v819 = vpack.c.bf16 %v769, %v767
        %v820 = vpack.c.bf16 %v770, %v768
        %v821 = vpack.c.bf16 %v773, %v771
        %v822 = vpack.c.bf16 %v774, %v772
        %v823 = vpack.c.bf16 %v777, %v775
        %v824 = vpack.c.bf16 %v778, %v776
        %v825 = vpack.c.bf16 %v781, %v779
        %v826 = vpack.c.bf16 %v782, %v780
        %v827 = vpack.c.bf16 %v785, %v783
        %v828 = vpack.c.bf16 %v786, %v784
        %v829 = vpack.c.bf16 %v789, %v787
        %v830 = vpack.c.bf16 %v790, %v788
        %v831 = vpack.c.bf16 %v793, %v791
        %v832 = vpack.c.bf16 %v794, %v792
        %v833 = vpack.c.bf16 %v797, %v795
        %v834 = vpack.c.bf16 %v798, %v796
        %v835 = vpack.c.bf16 %v801, %v799
        %v836 = vpack.c.bf16 %v802, %v800
        %v837 = vpack.c.bf16 %v805, %v803
        %v838 = vpack.c.bf16 %v806, %v804
        %v839 = vld [vmem:[%s3] sm:$0xf]
        %v840 = vld [vmem:[%s3 + $0x4] sm:$0xf]
        %v841 = vld [vmem:[%s3 + $0x8] sm:$0xf]
        %v842 = vld [vmem:[%s3 + $0xc] sm:$0xf]
        %v843 = vld [vmem:[%s3 + $0x10] sm:$0xf]
        %v844 = vld [vmem:[%s3 + $0x14] sm:$0xf]
        %v845 = vld [vmem:[%s3 + $0x18] sm:$0xf]
        %v846 = vld [vmem:[%s3 + $0x1c] sm:$0xf]
        %v847 = vld [vmem:[%s3 + $0x20] sm:$0xf]
        %v848 = vld [vmem:[%s3 + $0x24] sm:$0xf]
        %v849 = vld [vmem:[%s3 + $0x28] sm:$0xf]
        %v850 = vld [vmem:[%s3 + $0x2c] sm:$0xf]
        %v851 = vld [vmem:[%s3 + $0x30] sm:$0xf]
        %v852 = vld [vmem:[%s3 + $0x34] sm:$0xf]
        %v853 = vld [vmem:[%s3 + $0x38] sm:$0xf]
        %v854 = vld [vmem:[%s3 + $0x3c] sm:$0xf]
        %v855 = vld [vmem:[%s3 + $0x40] sm:$0xf]
        %v856 = vld [vmem:[%s3 + $0x44] sm:$0xf]
        %v857 = vld [vmem:[%s3 + $0x48] sm:$0xf]
        %v858 = vld [vmem:[%s3 + $0x4c] sm:$0xf]
        %v859 = vld [vmem:[%s3 + $0x50] sm:$0xf]
        %v860 = vld [vmem:[%s3 + $0x54] sm:$0xf]
        %v861 = vld [vmem:[%s3 + $0x58] sm:$0xf]
        %v862 = vld [vmem:[%s3 + $0x5c] sm:$0xf]
        %v863 = vld [vmem:[%s3 + $0x60] sm:$0xf]
        %v864 = vld [vmem:[%s3 + $0x64] sm:$0xf]
        %v865 = vld [vmem:[%s3 + $0x68] sm:$0xf]
        %v866 = vld [vmem:[%s3 + $0x6c] sm:$0xf]
        %v867 = vld [vmem:[%s3 + $0x70] sm:$0xf]
        %v868 = vld [vmem:[%s3 + $0x74] sm:$0xf]
        %v869 = vld [vmem:[%s3 + $0x78] sm:$0xf]
        %v870 = vld [vmem:[%s3 + $0x7c] sm:$0xf]
        %v871 = vld [vmem:[%s4] sm:$0x1]
        %v873 = vperm.slane %v871, 0
        %v907 = vunpack.c.l.b16 %v839
        %v908 = vunpack.c.l.b16 %v840
        %v909 = vunpack.c.l.b16 %v841
        %v910 = vunpack.c.l.b16 %v842
        %v911 = vunpack.c.l.b16 %v843
        %v912 = vunpack.c.l.b16 %v844
        %v913 = vunpack.c.l.b16 %v845
        %v914 = vunpack.c.l.b16 %v846
        %v915 = vunpack.c.l.b16 %v847
        %v916 = vunpack.c.l.b16 %v848
        %v917 = vunpack.c.l.b16 %v849
        %v918 = vunpack.c.l.b16 %v850
        %v919 = vunpack.c.l.b16 %v851
        %v920 = vunpack.c.l.b16 %v852
        %v921 = vunpack.c.l.b16 %v853
        %v922 = vunpack.c.l.b16 %v854
        %v923 = vunpack.c.l.b16 %v855
        %v924 = vunpack.c.l.b16 %v856
        %v925 = vunpack.c.l.b16 %v857
        %v926 = vunpack.c.l.b16 %v858
        %v927 = vunpack.c.l.b16 %v859
        %v928 = vunpack.c.l.b16 %v860
        %v929 = vunpack.c.l.b16 %v861
        %v930 = vunpack.c.l.b16 %v862
        %v931 = vunpack.c.l.b16 %v863
        %v932 = vunpack.c.l.b16 %v864
        %v933 = vunpack.c.l.b16 %v865
        %v934 = vunpack.c.l.b16 %v866
        %v935 = vunpack.c.l.b16 %v867
        %v936 = vunpack.c.l.b16 %v868
        %v937 = vunpack.c.l.b16 %v869
        %v938 = vunpack.c.l.b16 %v870
        %v939 = vpack.c.b16 %v908, %v907
        %v940 = vpack.c.b16 %v910, %v909
        %v941 = vpack.c.b16 %v912, %v911
        %v942 = vpack.c.b16 %v914, %v913
        %v943 = vpack.c.b16 %v916, %v915
        %v944 = vpack.c.b16 %v918, %v917
        %v945 = vpack.c.b16 %v920, %v919
        %v946 = vpack.c.b16 %v922, %v921
        %v947 = vpack.c.b16 %v924, %v923
        %v948 = vpack.c.b16 %v926, %v925
        %v949 = vpack.c.b16 %v928, %v927
        %v950 = vpack.c.b16 %v930, %v929
        %v951 = vpack.c.b16 %v932, %v931
        %v952 = vpack.c.b16 %v934, %v933
        %v953 = vpack.c.b16 %v936, %v935
        %v954 = vpack.c.b16 %v938, %v937
        %971 = vmatpush.bf16.msra.mxu0 %v946
        %972 = vmatpush.bf16.msra.mxu0 %v945
        %973 = vmatpush.bf16.msra.mxu0 %v944
        %974 = vmatpush.bf16.msra.mxu0 %v943
        %975 = vmatpush.bf16.msra.mxu0 %v942
        %976 = vmatpush.bf16.msra.mxu0 %v941
        %977 = vmatpush.bf16.msra.mxu0 %v940
        %978 = vmatpush.bf16.msra.mxu0 %v939
        %979 = vmatmul.bf16.gmra.mxu0 %v807
        %v980 = vpop.f32.mrf.mxu0
        %v981 = vadd.f32 %v873, %v980
        %v982 = vpop.f32.mrf.mxu0
        %v983 = vadd.f32 %v873, %v982
        %984 = vmatmul.bf16.gmra.mxu0 %v809
        %v985 = vpop.f32.mrf.mxu0
        %v986 = vadd.f32 %v873, %v985
        %v987 = vpop.f32.mrf.mxu0
        %v988 = vadd.f32 %v873, %v987
        %989 = vmatmul.bf16.gmra.mxu0 %v811
        %v990 = vpop.f32.mrf.mxu0
        %v991 = vadd.f32 %v873, %v990
        %v992 = vpop.f32.mrf.mxu0
        %v993 = vadd.f32 %v873, %v992
        %994 = vmatmul.bf16.gmra.mxu0 %v813
        %v995 = vpop.f32.mrf.mxu0
        %v996 = vadd.f32 %v873, %v995
        %v997 = vpop.f32.mrf.mxu0
        %v998 = vadd.f32 %v873, %v997
        %999 = vmatmul.bf16.gmra.mxu0 %v815
        %v1000 = vpop.f32.mrf.mxu0
        %v1001 = vadd.f32 %v873, %v1000
        %v1002 = vpop.f32.mrf.mxu0
        %v1003 = vadd.f32 %v873, %v1002
        %1004 = vmatmul.bf16.gmra.mxu0 %v817
        %v1005 = vpop.f32.mrf.mxu0
        %v1006 = vadd.f32 %v873, %v1005
        %v1007 = vpop.f32.mrf.mxu0
        %v1008 = vadd.f32 %v873, %v1007
        %1009 = vmatmul.bf16.gmra.mxu0 %v819
        %v1010 = vpop.f32.mrf.mxu0
        %v1011 = vadd.f32 %v873, %v1010
        %v1012 = vpop.f32.mrf.mxu0
        %v1013 = vadd.f32 %v873, %v1012
        %1014 = vmatmul.bf16.gmra.mxu0 %v821
        %v1015 = vpop.f32.mrf.mxu0
        %v1016 = vadd.f32 %v873, %v1015
        %v1017 = vpop.f32.mrf.mxu0
        %v1018 = vadd.f32 %v873, %v1017
        %1019 = vmatmul.bf16.gmra.mxu0 %v823
        %v1020 = vpop.f32.mrf.mxu0
        %v1021 = vadd.f32 %v873, %v1020
        %v1022 = vpop.f32.mrf.mxu0
        %v1023 = vadd.f32 %v873, %v1022
        %1024 = vmatmul.bf16.gmra.mxu0 %v825
        %v1025 = vpop.f32.mrf.mxu0
        %v1026 = vadd.f32 %v873, %v1025
        %v1027 = vpop.f32.mrf.mxu0
        %v1028 = vadd.f32 %v873, %v1027
        %1029 = vmatmul.bf16.gmra.mxu0 %v827
        %v1030 = vpop.f32.mrf.mxu0
        %v1031 = vadd.f32 %v873, %v1030
        %v1032 = vpop.f32.mrf.mxu0
        %v1033 = vadd.f32 %v873, %v1032
        %1034 = vmatmul.bf16.gmra.mxu0 %v829
        %v1035 = vpop.f32.mrf.mxu0
        %v1036 = vadd.f32 %v873, %v1035
        %v1037 = vpop.f32.mrf.mxu0
        %v1038 = vadd.f32 %v873, %v1037
        %1039 = vmatmul.bf16.gmra.mxu0 %v831
        %v1040 = vpop.f32.mrf.mxu0
        %v1041 = vadd.f32 %v873, %v1040
        %v1042 = vpop.f32.mrf.mxu0
        %v1043 = vadd.f32 %v873, %v1042
        %1044 = vmatmul.bf16.gmra.mxu0 %v833
        %v1045 = vpop.f32.mrf.mxu0
        %v1046 = vadd.f32 %v873, %v1045
        %v1047 = vpop.f32.mrf.mxu0
        %v1048 = vadd.f32 %v873, %v1047
        %1049 = vmatmul.bf16.gmra.mxu0 %v835
        %v1050 = vpop.f32.mrf.mxu0
        %v1051 = vadd.f32 %v873, %v1050
        %v1052 = vpop.f32.mrf.mxu0
        %v1053 = vadd.f32 %v873, %v1052
        %1054 = vmatmul.bf16.gmra.mxu0 %v837
        %v1055 = vpop.f32.mrf.mxu0
        %v1056 = vadd.f32 %v873, %v1055
        %v1057 = vpop.f32.mrf.mxu0
        %v1058 = vadd.f32 %v873, %v1057
        %1059 = vdwg.mxu0
        %1060 = vmatpush.bf16.msra.mxu0 %v954
        %1061 = vmatpush.bf16.msra.mxu0 %v953
        %1062 = vmatpush.bf16.msra.mxu0 %v952
        %1063 = vmatpush.bf16.msra.mxu0 %v951
        %1064 = vmatpush.bf16.msra.mxu0 %v950
        %1065 = vmatpush.bf16.msra.mxu0 %v949
        %1066 = vmatpush.bf16.msra.mxu0 %v948
        %1067 = vmatpush.bf16.msra.mxu0 %v947
        %1068 = vmatmul.bf16.gmra.mxu0 %v808
        %v1069 = vpop.f32.mrf.mxu0
        %v1070 = vadd.f32 %v981, %v1069
        %v1071 = vpop.f32.mrf.mxu0
        %v1072 = vadd.f32 %v983, %v1071
        %1073 = vmatmul.bf16.gmra.mxu0 %v810
        %v1074 = vpop.f32.mrf.mxu0
        %v1075 = vadd.f32 %v986, %v1074
        %v1076 = vpop.f32.mrf.mxu0
        %v1077 = vadd.f32 %v988, %v1076
        %1078 = vmatmul.bf16.gmra.mxu0 %v812
        %v1079 = vpop.f32.mrf.mxu0
        %v1080 = vadd.f32 %v991, %v1079
        %v1081 = vpop.f32.mrf.mxu0
        %v1082 = vadd.f32 %v993, %v1081
        %1083 = vmatmul.bf16.gmra.mxu0 %v814
        %v1084 = vpop.f32.mrf.mxu0
        %v1085 = vadd.f32 %v996, %v1084
        %v1086 = vpop.f32.mrf.mxu0
        %v1087 = vadd.f32 %v998, %v1086
        %1088 = vmatmul.bf16.gmra.mxu0 %v816
        %v1089 = vpop.f32.mrf.mxu0
        %v1090 = vadd.f32 %v1001, %v1089
        %v1091 = vpop.f32.mrf.mxu0
        %v1092 = vadd.f32 %v1003, %v1091
        %1093 = vmatmul.bf16.gmra.mxu0 %v818
        %v1094 = vpop.f32.mrf.mxu0
        %v1095 = vadd.f32 %v1006, %v1094
        %v1096 = vpop.f32.mrf.mxu0
        %v1097 = vadd.f32 %v1008, %v1096
        %1098 = vmatmul.bf16.gmra.mxu0 %v820
        %v1099 = vpop.f32.mrf.mxu0
        %v1100 = vadd.f32 %v1011, %v1099
        %v1101 = vpop.f32.mrf.mxu0
        %v1102 = vadd.f32 %v1013, %v1101
        %1103 = vmatmul.bf16.gmra.mxu0 %v822
        %v1104 = vpop.f32.mrf.mxu0
        %v1105 = vadd.f32 %v1016, %v1104
        %v1106 = vpop.f32.mrf.mxu0
        %v1107 = vadd.f32 %v1018, %v1106
        %1108 = vmatmul.bf16.gmra.mxu0 %v824
        %v1109 = vpop.f32.mrf.mxu0
        %v1110 = vadd.f32 %v1021, %v1109
        %v1111 = vpop.f32.mrf.mxu0
        %v1112 = vadd.f32 %v1023, %v1111
        %1113 = vmatmul.bf16.gmra.mxu0 %v826
        %v1114 = vpop.f32.mrf.mxu0
        %v1115 = vadd.f32 %v1026, %v1114
        %v1116 = vpop.f32.mrf.mxu0
        %v1117 = vadd.f32 %v1028, %v1116
        %1118 = vmatmul.bf16.gmra.mxu0 %v828
        %v1119 = vpop.f32.mrf.mxu0
        %v1120 = vadd.f32 %v1031, %v1119
        %v1121 = vpop.f32.mrf.mxu0
        %v1122 = vadd.f32 %v1033, %v1121
        %1123 = vmatmul.bf16.gmra.mxu0 %v830
        %v1124 = vpop.f32.mrf.mxu0
        %v1125 = vadd.f32 %v1036, %v1124
        %v1126 = vpop.f32.mrf.mxu0
        %v1127 = vadd.f32 %v1038, %v1126
        %1128 = vmatmul.bf16.gmra.mxu0 %v832
        %v1129 = vpop.f32.mrf.mxu0
        %v1130 = vadd.f32 %v1041, %v1129
        %v1131 = vpop.f32.mrf.mxu0
        %v1132 = vadd.f32 %v1043, %v1131
        %1133 = vmatmul.bf16.gmra.mxu0 %v834
        %v1134 = vpop.f32.mrf.mxu0
        %v1135 = vadd.f32 %v1046, %v1134
        %v1136 = vpop.f32.mrf.mxu0
        %v1137 = vadd.f32 %v1048, %v1136
        %1138 = vmatmul.bf16.gmra.mxu0 %v836
        %v1139 = vpop.f32.mrf.mxu0
        %v1140 = vadd.f32 %v1051, %v1139
        %v1141 = vpop.f32.mrf.mxu0
        %v1142 = vadd.f32 %v1053, %v1141
        %1143 = vmatmul.bf16.gmra.mxu0 %v838
        %v1144 = vpop.f32.mrf.mxu0
        %v1145 = vadd.f32 %v1056, %v1144
        %v1146 = vpop.f32.mrf.mxu0
        %v1147 = vadd.f32 %v1058, %v1146
        %1148 = vdwg.mxu0
        %v1149 = vmax.f32 %v1070, 0.0
        %v1150 = vmax.f32 %v1072, 0.0
        %v1151 = vmax.f32 %v1075, 0.0
        %v1152 = vmax.f32 %v1077, 0.0
        %v1153 = vmax.f32 %v1080, 0.0
        %v1154 = vmax.f32 %v1082, 0.0
        %v1155 = vmax.f32 %v1085, 0.0
        %v1156 = vmax.f32 %v1087, 0.0
        %v1157 = vmax.f32 %v1090, 0.0
        %v1158 = vmax.f32 %v1092, 0.0
        %v1159 = vmax.f32 %v1095, 0.0
        %v1160 = vmax.f32 %v1097, 0.0
        %v1161 = vmax.f32 %v1100, 0.0
        %v1162 = vmax.f32 %v1102, 0.0
        %v1163 = vmax.f32 %v1105, 0.0
        %v1164 = vmax.f32 %v1107, 0.0
        %v1165 = vmax.f32 %v1110, 0.0
        %v1166 = vmax.f32 %v1112, 0.0
        %v1167 = vmax.f32 %v1115, 0.0
        %v1168 = vmax.f32 %v1117, 0.0
        %v1169 = vmax.f32 %v1120, 0.0
        %v1170 = vmax.f32 %v1122, 0.0
        %v1171 = vmax.f32 %v1125, 0.0
        %v1172 = vmax.f32 %v1127, 0.0
        %v1173 = vmax.f32 %v1130, 0.0
        %v1174 = vmax.f32 %v1132, 0.0
        %v1175 = vmax.f32 %v1135, 0.0
        %v1176 = vmax.f32 %v1137, 0.0
        %v1177 = vmax.f32 %v1140, 0.0
        %v1178 = vmax.f32 %v1142, 0.0
        %v1179 = vmax.f32 %v1145, 0.0
        %v1180 = vmax.f32 %v1147, 0.0
        %v1181 = vpack.c.bf16 %v1150, %v1149
        %v1182 = vpack.c.bf16 %v1152, %v1151
        %v1183 = vpack.c.bf16 %v1154, %v1153
        %v1184 = vpack.c.bf16 %v1156, %v1155
        %v1185 = vpack.c.bf16 %v1158, %v1157
        %v1186 = vpack.c.bf16 %v1160, %v1159
        %v1187 = vpack.c.bf16 %v1162, %v1161
        %v1188 = vpack.c.bf16 %v1164, %v1163
        %v1189 = vpack.c.bf16 %v1166, %v1165
        %v1190 = vpack.c.bf16 %v1168, %v1167
        %v1191 = vpack.c.bf16 %v1170, %v1169
        %v1192 = vpack.c.bf16 %v1172, %v1171
        %v1193 = vpack.c.bf16 %v1174, %v1173
        %v1194 = vpack.c.bf16 %v1176, %v1175
        %v1195 = vpack.c.bf16 %v1178, %v1177
        %v1196 = vpack.c.bf16 %v1180, %v1179
        %v1197 = vld [vmem:[%s5] sm:$0xf]
        %v1198 = vld [vmem:[%s5 + $0x4] sm:$0xf]
        %v1199 = vld [vmem:[%s5 + $0x8] sm:$0xf]
        %v1200 = vld [vmem:[%s5 + $0xc] sm:$0xf]
        %v1201 = vld [vmem:[%s5 + $0x10] sm:$0xf]
        %v1202 = vld [vmem:[%s5 + $0x14] sm:$0xf]
        %v1203 = vld [vmem:[%s5 + $0x18] sm:$0xf]
        %v1204 = vld [vmem:[%s5 + $0x1c] sm:$0xf]
        %v1205 = vld [vmem:[%s5 + $0x20] sm:$0xf]
        %v1206 = vld [vmem:[%s5 + $0x24] sm:$0xf]
        %v1207 = vld [vmem:[%s5 + $0x28] sm:$0xf]
        %v1208 = vld [vmem:[%s5 + $0x2c] sm:$0xf]
        %v1209 = vld [vmem:[%s5 + $0x30] sm:$0xf]
        %v1210 = vld [vmem:[%s5 + $0x34] sm:$0xf]
        %v1211 = vld [vmem:[%s5 + $0x38] sm:$0xf]
        %v1212 = vld [vmem:[%s5 + $0x3c] sm:$0xf]
        %v1213 = vld [vmem:[%s6] sm:$0x1]
        %v1215 = vperm.slane %v1213, 0
        %v1233 = vunpack.c.l.b16 %v1197
        %v1234 = vunpack.c.l.b16 %v1198
        %v1235 = vunpack.c.l.b16 %v1199
        %v1236 = vunpack.c.l.b16 %v1200
        %v1237 = vunpack.c.l.b16 %v1201
        %v1238 = vunpack.c.l.b16 %v1202
        %v1239 = vunpack.c.l.b16 %v1203
        %v1240 = vunpack.c.l.b16 %v1204
        %v1241 = vunpack.c.l.b16 %v1205
        %v1242 = vunpack.c.l.b16 %v1206
        %v1243 = vunpack.c.l.b16 %v1207
        %v1244 = vunpack.c.l.b16 %v1208
        %v1245 = vunpack.c.l.b16 %v1209
        %v1246 = vunpack.c.l.b16 %v1210
        %v1247 = vunpack.c.l.b16 %v1211
        %v1248 = vunpack.c.l.b16 %v1212
        %v1249 = vpack.c.b16 %v1234, %v1233
        %v1250 = vpack.c.b16 %v1236, %v1235
        %v1251 = vpack.c.b16 %v1238, %v1237
        %v1252 = vpack.c.b16 %v1240, %v1239
        %v1253 = vpack.c.b16 %v1242, %v1241
        %v1254 = vpack.c.b16 %v1244, %v1243
        %v1255 = vpack.c.b16 %v1246, %v1245
        %v1256 = vpack.c.b16 %v1248, %v1247
        %1265 = vmatpush.bf16.msra.mxu0 %v1256
        %1266 = vmatpush.bf16.msra.mxu0 %v1255
        %1267 = vmatpush.bf16.msra.mxu0 %v1254
        %1268 = vmatpush.bf16.msra.mxu0 %v1253
        %1269 = vmatpush.bf16.msra.mxu0 %v1252
        %1270 = vmatpush.bf16.msra.mxu0 %v1251
        %1271 = vmatpush.bf16.msra.mxu0 %v1250
        %1272 = vmatpush.bf16.msra.mxu0 %v1249
        %1273 = vmatmul.bf16.gmra.mxu0 %v1181
        %v1274 = vpop.f32.mrf.mxu0
        %v1275 = vadd.f32 %v1215, %v1274
        %v1276 = vpop.f32.mrf.mxu0
        %v1277 = vadd.f32 %v1215, %v1276
        %1278 = vmatmul.bf16.gmra.mxu0 %v1182
        %v1279 = vpop.f32.mrf.mxu0
        %v1280 = vadd.f32 %v1215, %v1279
        %v1281 = vpop.f32.mrf.mxu0
        %v1282 = vadd.f32 %v1215, %v1281
        %1283 = vmatmul.bf16.gmra.mxu0 %v1183
        %v1284 = vpop.f32.mrf.mxu0
        %v1285 = vadd.f32 %v1215, %v1284
        %v1286 = vpop.f32.mrf.mxu0
        %v1287 = vadd.f32 %v1215, %v1286
        %1288 = vmatmul.bf16.gmra.mxu0 %v1184
        %v1289 = vpop.f32.mrf.mxu0
        %v1290 = vadd.f32 %v1215, %v1289
        %v1291 = vpop.f32.mrf.mxu0
        %v1292 = vadd.f32 %v1215, %v1291
        %1293 = vmatmul.bf16.gmra.mxu0 %v1185
        %v1294 = vpop.f32.mrf.mxu0
        %v1295 = vadd.f32 %v1215, %v1294
        %v1296 = vpop.f32.mrf.mxu0
        %v1297 = vadd.f32 %v1215, %v1296
        %1298 = vmatmul.bf16.gmra.mxu0 %v1186
        %v1299 = vpop.f32.mrf.mxu0
        %v1300 = vadd.f32 %v1215, %v1299
        %v1301 = vpop.f32.mrf.mxu0
        %v1302 = vadd.f32 %v1215, %v1301
        %1303 = vmatmul.bf16.gmra.mxu0 %v1187
        %v1304 = vpop.f32.mrf.mxu0
        %v1305 = vadd.f32 %v1215, %v1304
        %v1306 = vpop.f32.mrf.mxu0
        %v1307 = vadd.f32 %v1215, %v1306
        %1308 = vmatmul.bf16.gmra.mxu0 %v1188
        %v1309 = vpop.f32.mrf.mxu0
        %v1310 = vadd.f32 %v1215, %v1309
        %v1311 = vpop.f32.mrf.mxu0
        %v1312 = vadd.f32 %v1215, %v1311
        %1313 = vmatmul.bf16.gmra.mxu0 %v1189
        %v1314 = vpop.f32.mrf.mxu0
        %v1315 = vadd.f32 %v1215, %v1314
        %v1316 = vpop.f32.mrf.mxu0
        %v1317 = vadd.f32 %v1215, %v1316
        %1318 = vmatmul.bf16.gmra.mxu0 %v1190
        %v1319 = vpop.f32.mrf.mxu0
        %v1320 = vadd.f32 %v1215, %v1319
        %v1321 = vpop.f32.mrf.mxu0
        %v1322 = vadd.f32 %v1215, %v1321
        %1323 = vmatmul.bf16.gmra.mxu0 %v1191
        %v1324 = vpop.f32.mrf.mxu0
        %v1325 = vadd.f32 %v1215, %v1324
        %v1326 = vpop.f32.mrf.mxu0
        %v1327 = vadd.f32 %v1215, %v1326
        %1328 = vmatmul.bf16.gmra.mxu0 %v1192
        %v1329 = vpop.f32.mrf.mxu0
        %v1330 = vadd.f32 %v1215, %v1329
        %v1331 = vpop.f32.mrf.mxu0
        %v1332 = vadd.f32 %v1215, %v1331
        %1333 = vmatmul.bf16.gmra.mxu0 %v1193
        %v1334 = vpop.f32.mrf.mxu0
        %v1335 = vadd.f32 %v1215, %v1334
        %v1336 = vpop.f32.mrf.mxu0
        %v1337 = vadd.f32 %v1215, %v1336
        %1338 = vmatmul.bf16.gmra.mxu0 %v1194
        %v1339 = vpop.f32.mrf.mxu0
        %v1340 = vadd.f32 %v1215, %v1339
        %v1341 = vpop.f32.mrf.mxu0
        %v1342 = vadd.f32 %v1215, %v1341
        %1343 = vmatmul.bf16.gmra.mxu0 %v1195
        %v1344 = vpop.f32.mrf.mxu0
        %v1345 = vadd.f32 %v1215, %v1344
        %v1346 = vpop.f32.mrf.mxu0
        %v1347 = vadd.f32 %v1215, %v1346
        %1348 = vmatmul.bf16.gmra.mxu0 %v1196
        %v1349 = vpop.f32.mrf.mxu0
        %v1350 = vadd.f32 %v1215, %v1349
        %v1351 = vpop.f32.mrf.mxu0
        %v1352 = vadd.f32 %v1215, %v1351
        %1353 = vdwg.mxu0
        %v1354 = vmax.f32 %v1275, 0.0
        %v1355 = vmax.f32 %v1277, 0.0
        %v1356 = vmax.f32 %v1280, 0.0
        %v1357 = vmax.f32 %v1282, 0.0
        %v1358 = vmax.f32 %v1285, 0.0
        %v1359 = vmax.f32 %v1287, 0.0
        %v1360 = vmax.f32 %v1290, 0.0
        %v1361 = vmax.f32 %v1292, 0.0
        %v1362 = vmax.f32 %v1295, 0.0
        %v1363 = vmax.f32 %v1297, 0.0
        %v1364 = vmax.f32 %v1300, 0.0
        %v1365 = vmax.f32 %v1302, 0.0
        %v1366 = vmax.f32 %v1305, 0.0
        %v1367 = vmax.f32 %v1307, 0.0
        %v1368 = vmax.f32 %v1310, 0.0
        %v1369 = vmax.f32 %v1312, 0.0
        %v1370 = vmax.f32 %v1315, 0.0
        %v1371 = vmax.f32 %v1317, 0.0
        %v1372 = vmax.f32 %v1320, 0.0
        %v1373 = vmax.f32 %v1322, 0.0
        %v1374 = vmax.f32 %v1325, 0.0
        %v1375 = vmax.f32 %v1327, 0.0
        %v1376 = vmax.f32 %v1330, 0.0
        %v1377 = vmax.f32 %v1332, 0.0
        %v1378 = vmax.f32 %v1335, 0.0
        %v1379 = vmax.f32 %v1337, 0.0
        %v1380 = vmax.f32 %v1340, 0.0
        %v1381 = vmax.f32 %v1342, 0.0
        %v1382 = vmax.f32 %v1345, 0.0
        %v1383 = vmax.f32 %v1347, 0.0
        %v1384 = vmax.f32 %v1350, 0.0
        %v1385 = vmax.f32 %v1352, 0.0
        %v1386 = vpack.c.bf16 %v1355, %v1354
        %v1387 = vpack.c.bf16 %v1357, %v1356
        %v1388 = vpack.c.bf16 %v1359, %v1358
        %v1389 = vpack.c.bf16 %v1361, %v1360
        %v1390 = vpack.c.bf16 %v1363, %v1362
        %v1391 = vpack.c.bf16 %v1365, %v1364
        %v1392 = vpack.c.bf16 %v1367, %v1366
        %v1393 = vpack.c.bf16 %v1369, %v1368
        %v1394 = vpack.c.bf16 %v1371, %v1370
        %v1395 = vpack.c.bf16 %v1373, %v1372
        %v1396 = vpack.c.bf16 %v1375, %v1374
        %v1397 = vpack.c.bf16 %v1377, %v1376
        %v1398 = vpack.c.bf16 %v1379, %v1378
        %v1399 = vpack.c.bf16 %v1381, %v1380
        %v1400 = vpack.c.bf16 %v1383, %v1382
        %v1401 = vpack.c.bf16 %v1385, %v1384
        %v1402 = vld [vmem:[%s7] sm:$0xf]
        %v1403 = vld [vmem:[%s7 + $0x4] sm:$0xf]
        %v1404 = vld [vmem:[%s7 + $0x8] sm:$0xf]
        %v1405 = vld [vmem:[%s7 + $0xc] sm:$0xf]
        %v1406 = vld [vmem:[%s7 + $0x10] sm:$0xf]
        %v1407 = vld [vmem:[%s7 + $0x14] sm:$0xf]
        %v1408 = vld [vmem:[%s7 + $0x18] sm:$0xf]
        %v1409 = vld [vmem:[%s7 + $0x1c] sm:$0xf]
        %v1410 = vld [vmem:[%s8] sm:$0xf]
        %v1411 = vld [vmem:[%s8 + $0x4] sm:$0xf]
        %v1412 = vld [vmem:[%s8 + $0x8] sm:$0xf]
        %v1413 = vld [vmem:[%s8 + $0xc] sm:$0xf]
        %v1414 = vld [vmem:[%s8 + $0x10] sm:$0xf]
        %v1415 = vld [vmem:[%s8 + $0x14] sm:$0xf]
        %v1422 = vunpack.c.l.b16 %v1410
        %v1423 = vunpack.c.l.b16 %v1411
        %v1424 = vunpack.c.l.b16 %v1412
        %v1425 = vunpack.c.l.b16 %v1413
        %v1426 = vunpack.c.l.b16 %v1414
        %v1427 = vunpack.c.l.b16 %v1415
        %v1428 = vpack.c.b16 %v1423, %v1422
        %v1429 = vpack.c.b16 %v1425, %v1424
        %v1430 = vpack.c.b16 %v1427, %v1426
        %1434 = vmatpush.bf16.msra.mxu0 0
        %1435 = vmatpush.bf16.msra.mxu0 0
        %1436 = vmatpush.bf16.msra.mxu0 0
        %1437 = vmatpush.bf16.msra.mxu0 0
        %1438 = vmatpush.bf16.msra.mxu0 0
        %1439 = vmatpush.bf16.msra.mxu0 %v1430
        %1440 = vmatpush.bf16.msra.mxu0 %v1429
        %1441 = vmatpush.bf16.msra.mxu0 %v1428
        %1442 = vmatmul.bf16.gmra.mxu0 %v518
        %v1443 = vpop.f32.mrf.mxu0
        %v1444 = vadd.f32 0.0, %v1443
        %v1445 = vpop.f32.mrf.mxu0
        %v1446 = vadd.f32 0.0, %v1445
        %1447 = vmatmul.bf16.gmra.mxu0 %v521
        %v1448 = vpop.f32.mrf.mxu0
        %v1449 = vadd.f32 0.0, %v1448
        %v1450 = vpop.f32.mrf.mxu0
        %v1451 = vadd.f32 0.0, %v1450
        %1452 = vmatmul.bf16.gmra.mxu0 %v524
        %v1453 = vpop.f32.mrf.mxu0
        %v1454 = vadd.f32 0.0, %v1453
        %v1455 = vpop.f32.mrf.mxu0
        %v1456 = vadd.f32 0.0, %v1455
        %1457 = vmatmul.bf16.gmra.mxu0 %v527
        %v1458 = vpop.f32.mrf.mxu0
        %v1459 = vadd.f32 0.0, %v1458
        %v1460 = vpop.f32.mrf.mxu0
        %v1461 = vadd.f32 0.0, %v1460
        %1462 = vmatmul.bf16.gmra.mxu0 %v530
        %v1463 = vpop.f32.mrf.mxu0
        %v1464 = vadd.f32 0.0, %v1463
        %v1465 = vpop.f32.mrf.mxu0
        %v1466 = vadd.f32 0.0, %v1465
        %1467 = vmatmul.bf16.gmra.mxu0 %v533
        %v1468 = vpop.f32.mrf.mxu0
        %v1469 = vadd.f32 0.0, %v1468
        %v1470 = vpop.f32.mrf.mxu0
        %v1471 = vadd.f32 0.0, %v1470
        %1472 = vmatmul.bf16.gmra.mxu0 %v536
        %v1473 = vpop.f32.mrf.mxu0
        %v1474 = vadd.f32 0.0, %v1473
        %v1475 = vpop.f32.mrf.mxu0
        %v1476 = vadd.f32 0.0, %v1475
        %1477 = vmatmul.bf16.gmra.mxu0 %v539
        %v1478 = vpop.f32.mrf.mxu0
        %v1479 = vadd.f32 0.0, %v1478
        %v1480 = vpop.f32.mrf.mxu0
        %v1481 = vadd.f32 0.0, %v1480
        %1482 = vmatmul.bf16.gmra.mxu0 %v542
        %v1483 = vpop.f32.mrf.mxu0
        %v1484 = vadd.f32 0.0, %v1483
        %v1485 = vpop.f32.mrf.mxu0
        %v1486 = vadd.f32 0.0, %v1485
        %1487 = vmatmul.bf16.gmra.mxu0 %v545
        %v1488 = vpop.f32.mrf.mxu0
        %v1489 = vadd.f32 0.0, %v1488
        %v1490 = vpop.f32.mrf.mxu0
        %v1491 = vadd.f32 0.0, %v1490
        %1492 = vmatmul.bf16.gmra.mxu0 %v548
        %v1493 = vpop.f32.mrf.mxu0
        %v1494 = vadd.f32 0.0, %v1493
        %v1495 = vpop.f32.mrf.mxu0
        %v1496 = vadd.f32 0.0, %v1495
        %1497 = vmatmul.bf16.gmra.mxu0 %v551
        %v1498 = vpop.f32.mrf.mxu0
        %v1499 = vadd.f32 0.0, %v1498
        %v1500 = vpop.f32.mrf.mxu0
        %v1501 = vadd.f32 0.0, %v1500
        %1502 = vmatmul.bf16.gmra.mxu0 %v554
        %v1503 = vpop.f32.mrf.mxu0
        %v1504 = vadd.f32 0.0, %v1503
        %v1505 = vpop.f32.mrf.mxu0
        %v1506 = vadd.f32 0.0, %v1505
        %1507 = vmatmul.bf16.gmra.mxu0 %v557
        %v1508 = vpop.f32.mrf.mxu0
        %v1509 = vadd.f32 0.0, %v1508
        %v1510 = vpop.f32.mrf.mxu0
        %v1511 = vadd.f32 0.0, %v1510
        %1512 = vmatmul.bf16.gmra.mxu0 %v560
        %v1513 = vpop.f32.mrf.mxu0
        %v1514 = vadd.f32 0.0, %v1513
        %v1515 = vpop.f32.mrf.mxu0
        %v1516 = vadd.f32 0.0, %v1515
        %1517 = vmatmul.bf16.gmra.mxu0 %v563
        %v1518 = vpop.f32.mrf.mxu0
        %v1519 = vadd.f32 0.0, %v1518
        %v1520 = vpop.f32.mrf.mxu0
        %v1521 = vadd.f32 0.0, %v1520
        %1522 = vdwg.mxu0
        %v1531 = vunpack.c.l.b16 %v1402
        %v1532 = vunpack.c.l.b16 %v1403
        %v1533 = vunpack.c.l.b16 %v1404
        %v1534 = vunpack.c.l.b16 %v1405
        %v1535 = vunpack.c.l.b16 %v1406
        %v1536 = vunpack.c.l.b16 %v1407
        %v1537 = vunpack.c.l.b16 %v1408
        %v1538 = vunpack.c.l.b16 %v1409
        %v1539 = vpack.c.b16 %v1532, %v1531
        %v1540 = vpack.c.b16 %v1534, %v1533
        %v1541 = vpack.c.b16 %v1536, %v1535
        %v1542 = vpack.c.b16 %v1538, %v1537
        %vm1547 = vcmask 523264
        %v1549 = vsel %vm1547, %v1386, 0
        %v1552 = vsel %vm1547, %v1387, 0
        %v1555 = vsel %vm1547, %v1388, 0
        %v1558 = vsel %vm1547, %v1389, 0
        %v1561 = vsel %vm1547, %v1390, 0
        %v1564 = vsel %vm1547, %v1391, 0
        %v1567 = vsel %vm1547, %v1392, 0
        %v1570 = vsel %vm1547, %v1393, 0
        %v1573 = vsel %vm1547, %v1394, 0
        %v1576 = vsel %vm1547, %v1395, 0
        %v1579 = vsel %vm1547, %v1396, 0
        %v1582 = vsel %vm1547, %v1397, 0
        %v1585 = vsel %vm1547, %v1398, 0
        %v1588 = vsel %vm1547, %v1399, 0
        %v1591 = vsel %vm1547, %v1400, 0
        %v1594 = vsel %vm1547, %v1401, 0
        %1596 = vmatpush.bf16.msra.mxu0 0
        %1597 = vmatpush.bf16.msra.mxu0 0
        %1598 = vmatpush.bf16.msra.mxu0 0
        %1599 = vmatpush.bf16.msra.mxu0 0
        %1600 = vmatpush.bf16.msra.mxu0 %v1542
        %1601 = vmatpush.bf16.msra.mxu0 %v1541
        %1602 = vmatpush.bf16.msra.mxu0 %v1540
        %1603 = vmatpush.bf16.msra.mxu0 %v1539
        %1604 = vmatmul.bf16.gmra.mxu0 %v1549
        %v1605 = vpop.f32.mrf.mxu0
        %v1606 = vadd.f32 %v1444, %v1605
        %v1607 = vpop.f32.mrf.mxu0
        %v1608 = vadd.f32 %v1446, %v1607
        %1609 = vmatmul.bf16.gmra.mxu0 %v1552
        %v1610 = vpop.f32.mrf.mxu0
        %v1611 = vadd.f32 %v1449, %v1610
        %v1612 = vpop.f32.mrf.mxu0
        %v1613 = vadd.f32 %v1451, %v1612
        %1614 = vmatmul.bf16.gmra.mxu0 %v1555
        %v1615 = vpop.f32.mrf.mxu0
        %v1616 = vadd.f32 %v1454, %v1615
        %v1617 = vpop.f32.mrf.mxu0
        %v1618 = vadd.f32 %v1456, %v1617
        %1619 = vmatmul.bf16.gmra.mxu0 %v1558
        %v1620 = vpop.f32.mrf.mxu0
        %v1621 = vadd.f32 %v1459, %v1620
        %v1622 = vpop.f32.mrf.mxu0
        %v1623 = vadd.f32 %v1461, %v1622
        %1624 = vmatmul.bf16.gmra.mxu0 %v1561
        %v1625 = vpop.f32.mrf.mxu0
        %v1626 = vadd.f32 %v1464, %v1625
        %v1627 = vpop.f32.mrf.mxu0
        %v1628 = vadd.f32 %v1466, %v1627
        %1629 = vmatmul.bf16.gmra.mxu0 %v1564
        %v1630 = vpop.f32.mrf.mxu0
        %v1631 = vadd.f32 %v1469, %v1630
        %v1632 = vpop.f32.mrf.mxu0
        %v1633 = vadd.f32 %v1471, %v1632
        %1634 = vmatmul.bf16.gmra.mxu0 %v1567
        %v1635 = vpop.f32.mrf.mxu0
        %v1636 = vadd.f32 %v1474, %v1635
        %v1637 = vpop.f32.mrf.mxu0
        %v1638 = vadd.f32 %v1476, %v1637
        %1639 = vmatmul.bf16.gmra.mxu0 %v1570
        %v1640 = vpop.f32.mrf.mxu0
        %v1641 = vadd.f32 %v1479, %v1640
        %v1642 = vpop.f32.mrf.mxu0
        %v1643 = vadd.f32 %v1481, %v1642
        %1644 = vmatmul.bf16.gmra.mxu0 %v1573
        %v1645 = vpop.f32.mrf.mxu0
        %v1646 = vadd.f32 %v1484, %v1645
        %v1647 = vpop.f32.mrf.mxu0
        %v1648 = vadd.f32 %v1486, %v1647
        %1649 = vmatmul.bf16.gmra.mxu0 %v1576
        %v1650 = vpop.f32.mrf.mxu0
        %v1651 = vadd.f32 %v1489, %v1650
        %v1652 = vpop.f32.mrf.mxu0
        %v1653 = vadd.f32 %v1491, %v1652
        %1654 = vmatmul.bf16.gmra.mxu0 %v1579
        %v1655 = vpop.f32.mrf.mxu0
        %v1656 = vadd.f32 %v1494, %v1655
        %v1657 = vpop.f32.mrf.mxu0
        %v1658 = vadd.f32 %v1496, %v1657
        %1659 = vmatmul.bf16.gmra.mxu0 %v1582
        %v1660 = vpop.f32.mrf.mxu0
        %v1661 = vadd.f32 %v1499, %v1660
        %v1662 = vpop.f32.mrf.mxu0
        %v1663 = vadd.f32 %v1501, %v1662
        %1664 = vmatmul.bf16.gmra.mxu0 %v1585
        %v1665 = vpop.f32.mrf.mxu0
        %v1666 = vadd.f32 %v1504, %v1665
        %v1667 = vpop.f32.mrf.mxu0
        %v1668 = vadd.f32 %v1506, %v1667
        %1669 = vmatmul.bf16.gmra.mxu0 %v1588
        %v1670 = vpop.f32.mrf.mxu0
        %v1671 = vadd.f32 %v1509, %v1670
        %v1672 = vpop.f32.mrf.mxu0
        %v1673 = vadd.f32 %v1511, %v1672
        %1674 = vmatmul.bf16.gmra.mxu0 %v1591
        %v1675 = vpop.f32.mrf.mxu0
        %v1676 = vadd.f32 %v1514, %v1675
        %v1677 = vpop.f32.mrf.mxu0
        %v1678 = vadd.f32 %v1516, %v1677
        %1679 = vmatmul.bf16.gmra.mxu0 %v1594
        %v1680 = vpop.f32.mrf.mxu0
        %v1681 = vadd.f32 %v1519, %v1680
        %v1682 = vpop.f32.mrf.mxu0
        %v1683 = vadd.f32 %v1521, %v1682
        %1684 = vdwg.mxu0
        %1685 = vxpose.xlu0.b32.start [1/16] %v1606, 128
        %1686 = vxpose.xlu0.b32.cont [2/16] %v1608, 128
        %1687 = vxpose.xlu0.b32.cont [3/16] %v1611, 128
        %1688 = vxpose.xlu0.b32.cont [4/16] %v1613, 128
        %1689 = vxpose.xlu0.b32.cont [5/16] %v1616, 128
        %1690 = vxpose.xlu0.b32.cont [6/16] %v1618, 128
        %1691 = vxpose.xlu0.b32.cont [7/16] %v1621, 128
        %1692 = vxpose.xlu0.b32.cont [8/16] %v1623, 128
        %1693 = vxpose.xlu0.b32.cont [9/16] %v1626, 128
        %1694 = vxpose.xlu0.b32.cont [10/16] %v1628, 128
        %1695 = vxpose.xlu0.b32.cont [11/16] %v1631, 128
        %1696 = vxpose.xlu0.b32.cont [12/16] %v1633, 128
        %1697 = vxpose.xlu0.b32.cont [13/16] %v1636, 128
        %1698 = vxpose.xlu0.b32.cont [14/16] %v1638, 128
        %1699 = vxpose.xlu0.b32.cont [15/16] %v1641, 128
        %1700 = vxpose.xlu0.b32.end [16/16] %v1643, 128
        %v1701 = vpop.trf.xlu0
        %v1702 = vpop.trf.xlu0
        %v1703 = vpop.trf.xlu0
        %v1704 = vpop.trf.xlu0
        %v1705 = vpop.trf.xlu0
        %v1706 = vpop.trf.xlu0
        %v1707 = vpop.trf.xlu0
        %v1708 = vpop.trf.xlu0
        %v1709 = vpop.trf.xlu0
        %v1710 = vpop.trf.xlu0
        %v1711 = vpop.trf.xlu0
        %v1712 = vpop.trf.xlu0
        %v1713 = vpop.trf.xlu0
        %v1714 = vpop.trf.xlu0
        %v1715 = vpop.trf.xlu0
        %v1716 = vpop.trf.xlu0
        %1717 = vxpose.xlu0.b32.start [1/16] %v1646, 128
        %1718 = vxpose.xlu0.b32.cont [2/16] %v1648, 128
        %1719 = vxpose.xlu0.b32.cont [3/16] %v1651, 128
        %1720 = vxpose.xlu0.b32.cont [4/16] %v1653, 128
        %1721 = vxpose.xlu0.b32.cont [5/16] %v1656, 128
        %1722 = vxpose.xlu0.b32.cont [6/16] %v1658, 128
        %1723 = vxpose.xlu0.b32.cont [7/16] %v1661, 128
        %1724 = vxpose.xlu0.b32.cont [8/16] %v1663, 128
        %1725 = vxpose.xlu0.b32.cont [9/16] %v1666, 128
        %1726 = vxpose.xlu0.b32.cont [10/16] %v1668, 128
        %1727 = vxpose.xlu0.b32.cont [11/16] %v1671, 128
        %1728 = vxpose.xlu0.b32.cont [12/16] %v1673, 128
        %1729 = vxpose.xlu0.b32.cont [13/16] %v1676, 128
        %1730 = vxpose.xlu0.b32.cont [14/16] %v1678, 128
        %1731 = vxpose.xlu0.b32.cont [15/16] %v1681, 128
        %1732 = vxpose.xlu0.b32.end [16/16] %v1683, 128
        %v1733 = vpop.trf.xlu0
        %v1734 = vpop.trf.xlu0
        %v1735 = vpop.trf.xlu0
        %v1736 = vpop.trf.xlu0
        %v1737 = vpop.trf.xlu0
        %v1738 = vpop.trf.xlu0
        %v1739 = vpop.trf.xlu0
        %v1740 = vpop.trf.xlu0
        %v1741 = vpop.trf.xlu0
        %v1742 = vpop.trf.xlu0
        %v1743 = vpop.trf.xlu0
        %v1744 = vpop.trf.xlu0
        %v1745 = vpop.trf.xlu0
        %v1746 = vpop.trf.xlu0
        %v1747 = vpop.trf.xlu0
        %v1748 = vpop.trf.xlu0
        %v1750 = vrot.slane %v1733, 7
        %vm1752 = vcmask 1040384
        %v1753 = vsel %vm1752, %v1701, %v1750
        %s1754 = sld [smem:[#allocation2]]
        %v1755 = vstv %s1754
        %v1756 = vadd.f32 %v1753, %v1755
        %v1757 = vand.u32 2147483647, %v1756
        %v1758 = vsub.f32 0.0, %v1757
        %v1759 = vmul.f32 %v1758, 1.442695
        %v1760 = vpow.pop %v1759
        %v1761 = vadd.f32 %v1760, 1.0
        %v1762 = vrcp.pop %v1761
        %v1763 = vmul.f32 %v1761, %v1762
        %v1764 = vsub.f32 1.0, %v1763
        %v1765 = vmul.f32 %v1762, %v1764
        %v1766 = vadd.f32 %v1762, %v1765
        %vm1767 = vweird.f32 %v1761
        %vm1768 = vweird.f32 %v1762
        %vm1769 = vmor %vm1767, %vm1768
        %v1770 = vsel %vm1769, %v1762, %v1766
        %v1771 = vand.u32 2147483647, %v1761
        %vm1772 = vcmp.eq.f32.partialorder %v1771, 8.507059e+37
        %v1773 = vand.u32 %v1761, 2147483648
        %v1774 = vor.u32 1.1754944e-38, %v1773
        %v1775 = vsel %vm1772, %v1774, %v1770
        %v1776 = vmul.f32 1.0, %v1775
        %vm1777 = vcmp.ge.f32.partialorder %v1756, 0.0
        %v1778 = vmul.f32 %v1760, %v1776
        %v1779 = vsel %vm1777, %v1776, %v1778
        %1780 = vst [vmem:[%s354] sm:$0x3] %v1779
        %s1781 = sand.u32 %s248, 1
        %s1782 = scalar_lea.sflag [#allocation4], %s1781
        %s1783 = sand.u32 %s248, 1
        %s1784 = smul.addr %s1783, 2
        %s1785 = scalar_lea.vmem [#allocation3], %s1784
        // Predicated region
        $region61: #{wide_and_deep_forward.1} parent=59 // pred_check
          %p1786 = pneg %p258
        $region62: #{wide_and_deep_forward.1} parent=59 // pred_check_branch
          %1788 = sbr.rel (%p1786) target = $region64
        $region63: #{wide_and_deep_forward.1} parent=59 // pred_region
          %1790 = vsyncadd %s1782, 0
          %s1791 = smul.addr %s25, 2
          %s1792 = scalar_lea.hbm %s10, %s1791
          %s1794 = sshll.u32 %s1785, 4
          %s1795 = int_to_ptr.vmem [resolvable:$true] %s1794
          %s1796 = sshll.u32 %s1792, 4
          %s1797 = int_to_ptr.hbm [resolvable:$true] %s1796
          %1799 = dma.vmem_to_hbm [thread:$0]  %s1795, 32, %s1797, %s1782
        $region64: #{wide_and_deep_forward.1} parent=59 // pred_fallthru
          _
      $region60: #{wide_and_deep_forward.1} parent=5 // pred_fallthru
        _
      %p1800 = scmp.le.s32.totalorder 2, %s20
      // Predicated region
      $region65: #{wide_and_deep_forward.1} parent=5 // pred_check
        %p1801 = pneg %p1800
      $region66: #{wide_and_deep_forward.1} parent=5 // pred_check_branch
        %1803 = sbr.rel (%p1801) target = $region68
      $region67: #{wide_and_deep_forward.1} parent=5 // pred_region
        %s1804 = ssub.s32 %s20, 2
        // Predicated region
        $region69: #{wide_and_deep_forward.1} parent=67 // pred_check
          %p1805 = pneg %p264
        $region70: #{wide_and_deep_forward.1} parent=67 // pred_check_branch
          %1807 = sbr.rel (%p1805) target = $region72
        $region71: #{wide_and_deep_forward.1} parent=67 // pred_region
          %s1808 = sand.u32 %s249, 1
          %s1809 = scalar_lea.sflag [#allocation4], %s1808
          %s1810 = sand.u32 %s249, 1
          %s1811 = smul.addr %s1810, 2
          %s1812 = scalar_lea.vmem [#allocation3], %s1811
          %1814 = dma.done %s1809, 32
        $region72: #{wide_and_deep_forward.1} parent=67 // pred_fallthru
          _
      $region68: #{wide_and_deep_forward.1} parent=5 // pred_fallthru
        _
    $region6: #{wide_and_deep_forward.1} parent=1 // loop_footer
      %s24 = sadd.s32 1, %s20
    $region7: #{wide_and_deep_forward.1} parent=1 // loop_footer_branch
      %19 = sbr.rel target = $region3
    $region8: #{wide_and_deep_forward.1} parent=1 // loop_exit
      _
    %1815 = vsyncpa [#allocation4], 1
    %s1816 = scalar_lea.sflag [#allocation4], 1
    %1817 = vsyncpa %s1816, 1

</llo_original>
